<compile_context>
chip_gen: v6e
topology: v6e:2x2x1
jax: 0.10.0
libtpu: 0.0.40
codegen_flags: <defaults>
</compile_context>

<pallas_src>
import functools
import math

import jax
import jax.numpy as jnp
from jax.experimental import pallas as pl
from jax.experimental.pallas import tpu as pltpu


def _round_up(x, m):
    return ((x + m - 1) // m) * m


def _cdiv(a, b):
    return -(-a // b)


def _vmem_capacity_bytes():
    try:
        return int(pltpu.get_tpu_info().vmem_capacity_bytes)
    except Exception:
        return 64 * 1024 * 1024   # conservative fallback: v7x per-TC VMEM


def _gcn_kernel(adj_ref, p_ref, s_ref, out_ref, acc_ref, deg_ref):
    """One (row-tile i, contraction-tile k) grid step.

    adj_ref : (tm, tk)  raw (un-normalized) adjacency tile, compute_dtype
    p_ref   : (tk, Ep)  pre-projected neighbor features  X @ W_neigh
    s_ref   : (tm, Ep)  f32 self term  X @ W_self + b  for this row tile
    out_ref : (tm, Ep)  output tile (written on the last k step only)
    acc_ref : (tm, Ep)  f32 VMEM accumulator for A @ P
    deg_ref : (tm, 1)   f32 VMEM accumulator for row degrees
    """
    k = pl.program_id(1)

    @pl.when(k == 0)
    def _init():
        acc_ref[...] = jnp.zeros_like(acc_ref)
        deg_ref[...] = jnp.zeros_like(deg_ref)

    adj = adj_ref[...]
    # Dominant O(N^2 * E) work on the MXU, f32 accumulation.
    acc_ref[...] += jnp.dot(adj, p_ref[...], preferred_element_type=jnp.float32)
    # Row degree |N_v| accumulated alongside (XLU lane reduce, f32).
    deg_ref[...] += jnp.sum(adj.astype(jnp.float32), axis=-1, keepdims=True)

    @pl.when(k == pl.num_programs(1) - 1)
    def _epilogue():
        inv_deg = 1.0 / jnp.maximum(deg_ref[...], 1.0)   # zero-degree clamp
        out_ref[...] = (acc_ref[...] * inv_deg + s_ref[...]).astype(out_ref.dtype)


def _pick_tiles(n, e_p, cs, out_bytes, vmem_budget, tm_cap, tk_cap):
    """Pick (tm, tk, n_rows_p, n_cols_p, per-step VMEM bytes)."""

    def step_bytes(tm, tk):
        return (2 * (tm * tk * cs            # adjacency tile (double-buffered)
                     + tk * e_p * cs          # P tile
                     + tm * e_p * 4)          # S tile (f32)
                + 2 * tm * e_p * out_bytes    # output tile
                + tm * e_p * 4                # acc scratch
                + tm * 128 * 4)               # deg scratch (lane-padded)

    # Shrink caps until the per-step allocation fits the VMEM budget.
    while step_bytes(tm_cap, tk_cap) > vmem_budget and (tm_cap > 128 or tk_cap > 256):
        if tk_cap > 256 and tk_cap >= tm_cap:
            tk_cap //= 2
        else:
            tm_cap = max(128, tm_cap // 2)

    # Contraction axis: 128-lane aligned; single k step when it fits the cap.
    n_cols_128 = _round_up(n, 128)
    tk = n_cols_128 if n_cols_128 <= tk_cap else tk_cap
    n_cols_p = _round_up(n, tk)

    # Row axis: only sublane (16) alignment needed; spread evenly over tiles.
    n_rows_16 = _round_up(n, 16)
    if n_rows_16 <= tm_cap:
        tm, n_rows_p = n_rows_16, n_rows_16
    else:
        n_row_tiles = _cdiv(n_rows_16, tm_cap)
        tm = _round_up(_cdiv(n_rows_16, n_row_tiles), 16)
        n_rows_p = n_row_tiles * tm

    return tm, tk, n_rows_p, n_cols_p, step_bytes(tm, tk)


@functools.partial(jax.jit, static_argnames=("compute_dtype",))
def graph_convolution(adj_mx, feats, weight, bias, *, compute_dtype=jnp.bfloat16):
    """Pallas-backed forward of GraphConvolution (mean aggregation).

    adj_mx : (N, N), feats : (N, F), weight : (2F, E), bias : (1, E)
    returns (N, E) in feats.dtype.
    """
    n, f = feats.shape
    two_f, e = weight.shape
    assert two_f == 2 * f
    assert adj_mx.shape == (n, n)
    assert bias.shape == (1, e)

    out_dtype = feats.dtype
    cs = jnp.dtype(compute_dtype).itemsize
    ob = jnp.dtype(out_dtype).itemsize
    e_p = _round_up(e, 128)

    # --- generation-aware tile caps / VMEM budget ----------------------------
    vmem_cap = _vmem_capacity_bytes()
    if vmem_cap >= 96 * 1024 * 1024:        # v5e / v6e: 128 MiB VMEM
        tm_cap, tk_cap = 512, 1024
    else:                                   # v7x: 64 MiB per TensorCore
        tm_cap, tk_cap = 256, 512
    vmem_budget = min(vmem_cap - 8 * 1024 * 1024, (3 * vmem_cap) // 4)

    tm, tk, n_rows_p, n_cols_p, step_bytes = _pick_tiles(
        n, e_p, cs, ob, vmem_budget, tm_cap, tk_cap)

    # --- wrapper-side pre-projections (cheap O(N F E) matmuls, f32) ----------
    feats_f32 = feats.astype(jnp.float32)
    s_mat = feats_f32 @ weight[:f].astype(jnp.float32) + bias.astype(jnp.float32)
    p_mat = (feats_f32 @ weight[f:].astype(jnp.float32)).astype(compute_dtype)

    s_p = jnp.zeros((n_rows_p, e_p), jnp.float32).at[:n, :e].set(s_mat)
    p_p = jnp.zeros((n_cols_p, e_p), compute_dtype).at[:n, :e].set(p_mat)

    # Raw adjacency: a single cast + pad pass over the O(N^2) data.
    if adj_mx.shape == (n_rows_p, n_cols_p) and adj_mx.dtype == compute_dtype:
        adj_p = adj_mx
    else:
        adj_p = jnp.zeros((n_rows_p, n_cols_p), compute_dtype).at[:n, :n].set(
            adj_mx.astype(compute_dtype))

    grid = (n_rows_p // tm, n_cols_p // tk)   # reduction axis last

    vmem_limit = int(min(max(step_bytes + 2 * 1024 * 1024, 16 * 1024 * 1024),
                         vmem_cap - 4 * 1024 * 1024))

    cost = pl.CostEstimate(
        flops=2 * n_rows_p * n_cols_p * e_p,
        transcendentals=0,
        bytes_accessed=(n_rows_p * n_cols_p * cs               # adjacency, once
                        + grid[0] * n_cols_p * e_p * cs        # P per row tile
                        + n_rows_p * e_p * 4                   # S
                        + n_rows_p * e_p * ob),                # output
    )

    out_p = pl.pallas_call(
        _gcn_kernel,
        out_shape=jax.ShapeDtypeStruct((n_rows_p, e_p), out_dtype),
        grid_spec=pltpu.PrefetchScalarGridSpec(
            num_scalar_prefetch=0,
            grid=grid,
            in_specs=[
                pl.BlockSpec((tm, tk), lambda i, k: (i, k)),    # adjacency
                pl.BlockSpec((tk, e_p), lambda i, k: (k, 0)),   # P = X @ W_neigh
                pl.BlockSpec((tm, e_p), lambda i, k: (i, 0)),   # S = X @ W_self + b
            ],
            out_specs=pl.BlockSpec((tm, e_p), lambda i, k: (i, 0)),
            scratch_shapes=[
                pltpu.VMEM((tm, e_p), jnp.float32),   # A @ P accumulator
                pltpu.VMEM((tm, 1), jnp.float32),     # row-degree accumulator
            ],
        ),
        compiler_params=pltpu.CompilerParams(
            dimension_semantics=("parallel", "arbitrary"),
            vmem_limit_bytes=vmem_limit,
        ),
        cost_estimate=cost,
    )(adj_p, p_p, s_p)

    return out_p[:n, :e]


if __name__ == "__main__":
    # Deliberately non-128-multiple shapes: rows pad only to a multiple of 16
    # (e.g. 300 -> 304/320), the contraction axis to 384 with a single k step.
    N, F, E = 300, 48, 40
    key = jax.random.PRNGKey(0)
    k_adj, k_feat, k_w, k_b = jax.random.split(key, 4)

    # Random binary adjacency with self-loops (degree >= 1).
    adj = (jax.random.uniform(k_adj, (N, N)) < 0.2).astype(jnp.float32)
    adj = jnp.maximum(adj, jnp.eye(N, dtype=jnp.float32))

    feats = jax.random.normal(k_feat, (N, F), dtype=jnp.float32)

    # Parameter init mirroring the PyTorch module: uniform(-stdv, stdv),
    # stdv = 1 / sqrt(num_embeds).
    stdv = 1.0 / math.sqrt(E)
    weight = jax.random.uniform(k_w, (2 * F, E), minval=-stdv, maxval=stdv,
                                dtype=jnp.float32)
    bias = jax.random.uniform(k_b, (1, E), minval=-stdv, maxval=stdv,
                              dtype=jnp.float32)

    # Pure-JAX f32 reference (exact module semantics).
    deg = jnp.maximum(jnp.sum(adj, axis=-1, keepdims=True), 1.0)
    ref = jnp.concatenate([feats, (adj @ feats) / deg], axis=-1) @ weight + bias

    # Default bf16-compute path (MXU-friendly, f32 accumulation + f32 1/deg).
    out = jax.block_until_ready(graph_convolution(adj, feats, weight, bias))
    assert out.shape == (N, E)
    assert jnp.allclose(out, ref, atol=3e-2, rtol=3e-2), (
        "bf16 path max abs err", float(jnp.max(jnp.abs(out - ref))))

    # f32-compute path (same kernel, different compute dtype).
    out_f32 = jax.block_until_ready(
        graph_convolution(adj, feats, weight, bias, compute_dtype=jnp.float32))
    assert jnp.allclose(out_f32, ref, atol=1e-3, rtol=1e-3), (
        "f32 path max abs err", float(jnp.max(jnp.abs(out_f32 - ref))))

    print("KERNEL_OK")
</pallas_src>

<mosaic_0001>
module attributes {stable_mosaic.version = 11 : i64} {
  func.func @_gcn_kernel(%arg0: i32, %arg1: i32, %arg2: memref<160x384xbf16, #tpu.memory_space<vmem>>, %arg3: memref<384x128xbf16, #tpu.memory_space<vmem>>, %arg4: memref<160x128xf32, #tpu.memory_space<vmem>>, %arg5: memref<160x128xf32, #tpu.memory_space<vmem>>, %arg6: memref<160x128xf32, #tpu.memory_space<vmem>>, %arg7: memref<160x1xf32, #tpu.memory_space<vmem>>) attributes {dimension_semantics = [#tpu.dimension_semantics<parallel>, #tpu.dimension_semantics<arbitrary>], iteration_bounds = array<i64: 2, 1>, scalar_prefetch = 0 : i64, scratch_operands = 2 : i64, tpu.core_type = #tpu.core_type<tc>, window_params = [{transform_indices = @transform_0, window_bounds = array<i64: 160, 384>}, {transform_indices = @transform_1, window_bounds = array<i64: 384, 128>}, {transform_indices = @transform_2, window_bounds = array<i64: 160, 128>}, {transform_indices = @transform_3, window_bounds = array<i64: 160, 128>}]} {
    %c0_i32 = arith.constant 0 : i32
    %0 = arith.cmpi eq, %arg1, %c0_i32 : i32
    %1 = arith.extui %0 : i1 to i32
    %c0_i32_0 = arith.constant 0 : i32
    %2 = arith.cmpi ne, %1, %c0_i32_0 : i32
    scf.if %2 {
      %cst_15 = arith.constant 0.000000e+00 : f32
      %18 = vector.broadcast %cst_15 : f32 to vector<160x128xf32>
      %c0_16 = arith.constant 0 : index
      %c0_17 = arith.constant 0 : index
      %19 = vector.load %arg6[%c0_16, %c0_17] : memref<160x128xf32, #tpu.memory_space<vmem>>, vector<160x128xf32>
      tpu.vector_store %arg6[%c0_16, %c0_17], %18 {strides = array<i32>} : memref<160x128xf32, #tpu.memory_space<vmem>>, vector<160x128xf32>,
      %cst_18 = arith.constant 0.000000e+00 : f32
      %20 = vector.broadcast %cst_18 : f32 to vector<160x1xf32>
      %c0_19 = arith.constant 0 : index
      %c0_20 = arith.constant 0 : index
      %21 = vector.load %arg7[%c0_19, %c0_20] : memref<160x1xf32, #tpu.memory_space<vmem>>, vector<160x1xf32>
      tpu.vector_store %arg7[%c0_19, %c0_20], %20 {strides = array<i32>} : memref<160x1xf32, #tpu.memory_space<vmem>>, vector<160x1xf32>,
    } else {
    }
    %c0 = arith.constant 0 : index
    %c0_1 = arith.constant 0 : index
    %3 = vector.load %arg2[%c0, %c0_1] : memref<160x384xbf16, #tpu.memory_space<vmem>>, vector<160x384xbf16>
    %c0_2 = arith.constant 0 : index
    %c0_3 = arith.constant 0 : index
    %4 = vector.load %arg6[%c0_2, %c0_3] : memref<160x128xf32, #tpu.memory_space<vmem>>, vector<160x128xf32>
    %c0_4 = arith.constant 0 : index
    %c0_5 = arith.constant 0 : index
    %5 = vector.load %arg3[%c0_4, %c0_5] : memref<384x128xbf16, #tpu.memory_space<vmem>>, vector<384x128xbf16>
    %cst = arith.constant dense<0.000000e+00> : vector<160x128xf32>
    %6 = tpu.matmul %3, %5, %cst {dimension_numbers = #tpu.dot_dimension_numbers<[1], [0], [0], [1], [0, 0, 1, 1], [], []>} : vector<160x384xbf16>, vector<384x128xbf16>, vector<160x128xf32> -> vector<160x128xf32>
    %7 = arith.addf %4, %6 : vector<160x128xf32>
    %c0_6 = arith.constant 0 : index
    %c0_7 = arith.constant 0 : index
    %8 = vector.load %arg6[%c0_6, %c0_7] : memref<160x128xf32, #tpu.memory_space<vmem>>, vector<160x128xf32>
    tpu.vector_store %arg6[%c0_6, %c0_7], %7 {strides = array<i32>} : memref<160x128xf32, #tpu.memory_space<vmem>>, vector<160x128xf32>,
    %c0_8 = arith.constant 0 : index
    %c0_9 = arith.constant 0 : index
    %9 = vector.load %arg7[%c0_8, %c0_9] : memref<160x1xf32, #tpu.memory_space<vmem>>, vector<160x1xf32>
    %10 = arith.extf %3 : vector<160x384xbf16> to vector<160x384xf32>
    %cst_10 = arith.constant dense<0.000000e+00> : vector<160xf32>
    %11 = vector.multi_reduction <add>, %10, %cst_10 [1] : vector<160x384xf32> to vector<160xf32>
    %12 = vector.shape_cast %11 : vector<160xf32> to vector<160x1xf32>
    %13 = arith.addf %9, %12 : vector<160x1xf32>
    %c0_11 = arith.constant 0 : index
    %c0_12 = arith.constant 0 : index
    %14 = vector.load %arg7[%c0_11, %c0_12] : memref<160x1xf32, #tpu.memory_space<vmem>>, vector<160x1xf32>
    tpu.vector_store %arg7[%c0_11, %c0_12], %13 {strides = array<i32>} : memref<160x1xf32, #tpu.memory_space<vmem>>, vector<160x1xf32>,
    %c0_i32_13 = arith.constant 0 : i32
    %15 = arith.cmpi eq, %arg1, %c0_i32_13 : i32
    %16 = arith.extui %15 : i1 to i32
    %c0_i32_14 = arith.constant 0 : i32
    %17 = arith.cmpi ne, %16, %c0_i32_14 : i32
    scf.if %17 {
      %c0_15 = arith.constant 0 : index
      %c0_16 = arith.constant 0 : index
      %18 = vector.load %arg7[%c0_15, %c0_16] : memref<160x1xf32, #tpu.memory_space<vmem>>, vector<160x1xf32>
      %cst_17 = arith.constant 1.000000e+00 : f32
      %19 = vector.broadcast %cst_17 : f32 to vector<160x1xf32>
      %20 = arith.maximumf %18, %19 : vector<160x1xf32>
      %cst_18 = arith.constant 1.000000e+00 : f32
      %21 = vector.broadcast %cst_18 : f32 to vector<160x1xf32>
      %22 = arith.divf %21, %20 : vector<160x1xf32>
      %c0_19 = arith.constant 0 : index
      %c0_20 = arith.constant 0 : index
      %23 = vector.load %arg6[%c0_19, %c0_20] : memref<160x128xf32, #tpu.memory_space<vmem>>, vector<160x128xf32>
      %24 = vector.broadcast %22 : vector<160x1xf32> to vector<160x128xf32>
      %25 = arith.mulf %23, %24 : vector<160x128xf32>
      %c0_21 = arith.constant 0 : index
      %c0_22 = arith.constant 0 : index
      %26 = vector.load %arg4[%c0_21, %c0_22] : memref<160x128xf32, #tpu.memory_space<vmem>>, vector<160x128xf32>
      %27 = arith.addf %25, %26 : vector<160x128xf32>
      %c0_23 = arith.constant 0 : index
      %c0_24 = arith.constant 0 : index
      %28 = vector.load %arg5[%c0_23, %c0_24] : memref<160x128xf32, #tpu.memory_space<vmem>>, vector<160x128xf32>
      tpu.vector_store %arg5[%c0_23, %c0_24], %27 {strides = array<i32>} : memref<160x128xf32, #tpu.memory_space<vmem>>, vector<160x128xf32>,
    } else {
    }
    return
  }
  func.func @transform_0(%arg0: i32, %arg1: i32) -> (i32, i32) {
    %c0_i32 = arith.constant 0 : i32
    return %arg0, %arg1 : i32, i32
  }
  func.func @transform_1(%arg0: i32, %arg1: i32) -> (i32, i32) {
    %c0_i32 = arith.constant 0 : i32
    %c0_i32_0 = arith.constant 0 : i32
    return %arg1, %c0_i32 : i32, i32
  }
  func.func @transform_2(%arg0: i32, %arg1: i32) -> (i32, i32) {
    %c0_i32 = arith.constant 0 : i32
    %c0_i32_0 = arith.constant 0 : i32
    return %arg0, %c0_i32 : i32, i32
  }
  func.func @transform_3(%arg0: i32, %arg1: i32) -> (i32, i32) {
    %c0_i32 = arith.constant 0 : i32
    %c0_i32_0 = arith.constant 0 : i32
    return %arg0, %c0_i32 : i32, i32
  }
}

</mosaic_0001>

<llo_original>
// kernel: graph_convolution.1
$region0: #{graph_convolution.1}
  #allocation0 [shape = 'u32[]', space=smem, size = 0x4, offset = 0x4, fixed_abs, tag = 'smem constant byte address 0x4 - core index']
  #allocation1 [shape = 'u32[144,128]{1,0:T(1,128)}', space=vmem, size = 0x12000, scoped, tag = 'internal scratch']
  #allocation2 [shape = 'f32[160,128]{1,0:T(8,128)}', space=vmem, size = 0x14000, scoped, tag = 'scratch operand']
  #allocation3 [shape = 'f32[160,1]{1,0:T(8,128)}', space=vmem, size = 0x14000, scoped, tag = 'scratch operand']
  %s0 = inlined_call_operand.vmem [shape: bf16[320,384], index: 0, kind: input, shape index: {}]
  %s1 = inlined_call_operand.vmem [shape: bf16[384,128], index: 1, kind: input, shape index: {}]
  %s2 = inlined_call_operand.vmem [shape: f32[320,128], index: 2, kind: input, shape index: {}]
  %s3 = inlined_call_operand.vmem [shape: f32[320,128], index: 3, kind: output, shape index: {}]
  %s4 = sld [smem:[#allocation0]]
  $region53: #{graph_convolution.1} parent=0
    _
  %s6 = ssub.s32 1, %s4
  %s7 = scalar_select 0, %s6, %s4
  loop: start=0, step=1, limit=4
  $region2: #{graph_convolution.1} parent=0 // loop_pre_header
    _
  $region3: #{graph_convolution.1} parent=0 // loop_header
    %s9 = sphi 0, %s13
    %p10 = scmp.ge.s32.totalorder %s9, 4
    %s16 = sphi 0, %s28
    %s17 = sphi 0, %s24
    %s18 = sphi 0, %s16
    %s19 = sphi 0, %s17
    %s20 = sphi 0, %s18
    %s21 = sphi 0, %s19
    %s33 = sphi 0, %s35
    %s36 = sphi 0, %s33
    %s37 = sphi 0, %s36
    %s53 = sphi 0, %s37
    %s59 = sphi 0, %s61
    %s62 = sphi 0, %s59
    %s63 = sphi 0, %s62
    %s79 = sphi 0, %s63
    %s85 = sphi 0, %s87
    %s88 = sphi 0, %s85
    %s89 = sphi 0, %s88
    %s105 = sphi 0, %s89
    %s111 = sphi 0, %s113
    %s114 = sphi 0, %s111
    %s115 = sphi 0, %s114
    %s131 = sphi 0, %s115
  $region4: #{graph_convolution.1} parent=0 // loop_header_branch
    %12 = sbr.rel (%p10) target = $region8
  $region5: #{graph_convolution.1} parent=0 // loop_body
    %s14 = ssub.s32 %s9, 1
    %s15 = ssub.s32 %s9, 2
    %s22 = sadd.s32 1, %s17
    %p23 = scmp.ge.s32.totalorder %s22, 1
    %s24 = scalar_select %p23, 0, %s22
    %s25 = sadd.s32 1, %s16
    %s26 = scalar_select %p23, %s25, %s16
    %p27 = scmp.ge.s32.totalorder %s26, 2
    %s28 = scalar_select %p27, 0, %s26
    %s29 = ssub.s32 %s16, %s28
    %s30 = ssub.s32 %s17, %s24
    %s31 = sor.u32 %s29, %s30
    %p32 = scmp.eq.s32.totalorder %s31, 0
    %s34 = sadd.s32 %s33, 1
    %s35 = scalar_select %p32, %s33, %s34
    %p38 = pneg %p32
    %p39 = scmp.eq.s32.totalorder %s9, 1
    %p40 = por %p38, %p39
    %p41 = scmp.ne.s32.totalorder %s33, %s36
    %p42 = scmp.eq.s32.totalorder %s9, 0
    %p43 = por %p41, %p42
    %p44 = scmp.ne.s32.totalorder %s33, %s36
    %p45 = scmp.eq.s32.totalorder %s14, 1
    %p46 = por %p44, %p45
    %p47 = scmp.ne.s32.totalorder %s36, %s37
    %p48 = scmp.eq.s32.totalorder %s14, 0
    %p49 = por %p47, %p48
    %p50 = scmp.ne.s32.totalorder %s36, %s37
    %p51 = scmp.eq.s32.totalorder %s15, 1
    %p52 = por %p50, %p51
    %p54 = scmp.ne.s32.totalorder %s37, %s53
    %p55 = scmp.eq.s32.totalorder %s15, 0
    %p56 = por %p54, %p55
    %s57 = ssub.s32 %s17, %s24
    %p58 = scmp.eq.s32.totalorder %s57, 0
    %s60 = sadd.s32 %s59, 1
    %s61 = scalar_select %p58, %s59, %s60
    %p64 = pneg %p58
    %p65 = scmp.eq.s32.totalorder %s9, 1
    %p66 = por %p64, %p65
    %p67 = scmp.ne.s32.totalorder %s59, %s62
    %p68 = scmp.eq.s32.totalorder %s9, 0
    %p69 = por %p67, %p68
    %p70 = scmp.ne.s32.totalorder %s59, %s62
    %p71 = scmp.eq.s32.totalorder %s14, 1
    %p72 = por %p70, %p71
    %p73 = scmp.ne.s32.totalorder %s62, %s63
    %p74 = scmp.eq.s32.totalorder %s14, 0
    %p75 = por %p73, %p74
    %p76 = scmp.ne.s32.totalorder %s62, %s63
    %p77 = scmp.eq.s32.totalorder %s15, 1
    %p78 = por %p76, %p77
    %p80 = scmp.ne.s32.totalorder %s63, %s79
    %p81 = scmp.eq.s32.totalorder %s15, 0
    %p82 = por %p80, %p81
    %s83 = ssub.s32 %s16, %s28
    %p84 = scmp.eq.s32.totalorder %s83, 0
    %s86 = sadd.s32 %s85, 1
    %s87 = scalar_select %p84, %s85, %s86
    %p90 = pneg %p84
    %p91 = scmp.eq.s32.totalorder %s9, 1
    %p92 = por %p90, %p91
    %p93 = scmp.ne.s32.totalorder %s85, %s88
    %p94 = scmp.eq.s32.totalorder %s9, 0
    %p95 = por %p93, %p94
    %p96 = scmp.ne.s32.totalorder %s85, %s88
    %p97 = scmp.eq.s32.totalorder %s14, 1
    %p98 = por %p96, %p97
    %p99 = scmp.ne.s32.totalorder %s88, %s89
    %p100 = scmp.eq.s32.totalorder %s14, 0
    %p101 = por %p99, %p100
    %p102 = scmp.ne.s32.totalorder %s88, %s89
    %p103 = scmp.eq.s32.totalorder %s15, 1
    %p104 = por %p102, %p103
    %p106 = scmp.ne.s32.totalorder %s89, %s105
    %p107 = scmp.eq.s32.totalorder %s15, 0
    %p108 = por %p106, %p107
    %s109 = ssub.s32 %s16, %s28
    %p110 = scmp.eq.s32.totalorder %s109, 0
    %s112 = sadd.s32 %s111, 1
    %s113 = scalar_select %p110, %s111, %s112
    %p116 = pneg %p110
    %p117 = scmp.eq.s32.totalorder %s9, 1
    %p118 = por %p116, %p117
    %p119 = scmp.ne.s32.totalorder %s111, %s114
    %p120 = scmp.eq.s32.totalorder %s9, 0
    %p121 = por %p119, %p120
    %p122 = scmp.ne.s32.totalorder %s111, %s114
    %p123 = scmp.eq.s32.totalorder %s14, 1
    %p124 = por %p122, %p123
    %p125 = scmp.ne.s32.totalorder %s114, %s115
    %p126 = scmp.eq.s32.totalorder %s14, 0
    %p127 = por %p125, %p126
    %p128 = scmp.ne.s32.totalorder %s114, %s115
    %p129 = scmp.eq.s32.totalorder %s15, 1
    %p130 = por %p128, %p129
    %p132 = scmp.ne.s32.totalorder %s115, %s131
    %p133 = scmp.eq.s32.totalorder %s15, 0
    %p134 = por %p132, %p133
    %p135 = scmp.le.s32.totalorder 1, %s9
    %p136 = scmp.lt.s32.totalorder %s9, 3
    %p137 = pnand %p135, %p136
    %p138 = pneg %p137
    // Predicated region
    $region9: #{graph_convolution.1} parent=5 // pred_check
      _
    $region10: #{graph_convolution.1} parent=5 // pred_check_branch
      %140 = sbr.rel (%p137) target = $region12
    $region11: #{graph_convolution.1} parent=5 // pred_region
      %s141 = ssub.s32 %s9, 1
      // Predicated region
      $region13: #{graph_convolution.1} parent=11 // pred_check
        %p142 = pneg %p75
      $region14: #{graph_convolution.1} parent=11 // pred_check_branch
        %144 = sbr.rel (%p142) target = $region16
      $region15: #{graph_convolution.1} parent=11 // pred_region
        %s145 = smul.u32 48, %s19
        %p146 = scmp.lt.s32.totalorder %s145, 47
        %s147 = scalar_select %p146, %s145, 47
        %s148 = smul.addr %s147, 4
        %s149 = scalar_lea.vmem %s1, %s148
        %s150 = smul.u32 48, %s19
      $region16: #{graph_convolution.1} parent=11 // pred_fallthru
        _
    $region12: #{graph_convolution.1} parent=5 // pred_fallthru
      _
    %p151 = scmp.lt.s32.totalorder %s9, 2
    // Predicated region
    $region17: #{graph_convolution.1} parent=5 // pred_check
      %p152 = pneg %p151
    $region18: #{graph_convolution.1} parent=5 // pred_check_branch
      %154 = sbr.rel (%p152) target = $region20
    $region19: #{graph_convolution.1} parent=5 // pred_region
      // Predicated region
      $region21: #{graph_convolution.1} parent=19 // pred_check
        %p155 = pneg %p43
      $region22: #{graph_convolution.1} parent=19 // pred_check_branch
        %157 = sbr.rel (%p155) target = $region24
      $region23: #{graph_convolution.1} parent=19 // pred_region
        %s158 = smul.u32 20, %s16
        %s159 = smul.u32 3, %s17
        %p160 = scmp.lt.s32.totalorder %s158, 39
        %s161 = scalar_select %p160, %s158, 39
        %p162 = scmp.lt.s32.totalorder %s159, 2
        %s163 = scalar_select %p162, %s159, 2
        %s164 = smul.addr %s161, 3
        %s165 = sadd.s32 %s163, %s164
        %s166 = smul.addr %s165, 4
        %s167 = scalar_lea.vmem %s0, %s166
        %s168 = smul.u32 20, %s16
        %s169 = smul.u32 3, %s17
      $region24: #{graph_convolution.1} parent=19 // pred_fallthru
        _
      // Predicated region
      $region25: #{graph_convolution.1} parent=19 // pred_check
        %p170 = pneg %p95
      $region26: #{graph_convolution.1} parent=19 // pred_check_branch
        %172 = sbr.rel (%p170) target = $region28
      $region27: #{graph_convolution.1} parent=19 // pred_region
        %s173 = smul.u32 20, %s16
        %p174 = scmp.lt.s32.totalorder %s173, 39
        %s175 = scalar_select %p174, %s173, 39
        %s176 = smul.addr %s175, 8
        %s177 = scalar_lea.vmem %s2, %s176
        %s178 = smul.u32 20, %s16
      $region28: #{graph_convolution.1} parent=19 // pred_fallthru
        _
    $region20: #{graph_convolution.1} parent=5 // pred_fallthru
      _
    %p179 = scmp.le.s32.totalorder 1, %s9
    %p180 = scmp.lt.s32.totalorder %s9, 3
    %p181 = pnand %p179, %p180
    %p182 = pneg %p181
    // Predicated region
    $region29: #{graph_convolution.1} parent=5 // pred_check
      _
    $region30: #{graph_convolution.1} parent=5 // pred_check_branch
      %184 = sbr.rel (%p181) target = $region32
    $region31: #{graph_convolution.1} parent=5 // pred_region
      %s185 = ssub.s32 %s9, 1
      %s186 = smul.u32 20, %s18
      %s187 = smul.u32 3, %s19
      %p188 = scmp.lt.s32.totalorder %s186, 39
      %s189 = scalar_select %p188, %s186, 39
      %p190 = scmp.lt.s32.totalorder %s187, 2
      %s191 = scalar_select %p190, %s187, 2
      %s192 = smul.addr %s189, 3
      %s193 = sadd.s32 %s191, %s192
      %s194 = smul.addr %s193, 4
      %s195 = scalar_lea.vmem %s0, %s194
      %p196 = pneg %p49
      %p197 = pneg %p46
      %s198 = smul.u32 48, %s19
      %p199 = scmp.lt.s32.totalorder %s198, 47
      %s200 = scalar_select %p199, %s198, 47
      %s201 = smul.addr %s200, 4
      %s202 = scalar_lea.vmem %s1, %s201
      %p203 = pneg %p75
      %p204 = pneg %p72
      %s205 = smul.u32 20, %s18
      %p206 = scmp.lt.s32.totalorder %s205, 39
      %s207 = scalar_select %p206, %s205, 39
      %s208 = smul.addr %s207, 8
      %s209 = scalar_lea.vmem %s2, %s208
      %p210 = pneg %p101
      %p211 = pneg %p98
      %p212 = pneg %p127
      %p213 = pneg %p124
      %s214 = smul.u32 20, %s18
      %p215 = scmp.lt.s32.totalorder %s214, 39
      %s216 = scalar_select %p215, %s214, 39
      %s217 = smul.addr %s216, 8
      %s218 = scalar_lea.vmem %s3, %s217
      %s219 = smul.u32 20, %s18
      %s220 = smul.u32 3, %s19
      %p221 = scmp.lt.s32.totalorder %s219, 39
      %s222 = scalar_select %p221, %s219, 39
      %p223 = scmp.lt.s32.totalorder %s220, 2
      %s224 = scalar_select %p223, %s220, 2
      %s225 = smul.addr %s222, 3
      %s226 = sadd.s32 %s224, %s225
      %s227 = smul.addr %s226, 4
      %s228 = scalar_lea.vmem %s0, %s227
      %s229 = smul.u32 20, %s18
      %s230 = smul.u32 3, %s19
      %s231 = smul.u32 48, %s19
      %p232 = scmp.lt.s32.totalorder %s231, 47
      %s233 = scalar_select %p232, %s231, 47
      %s234 = smul.addr %s233, 4
      %s235 = scalar_lea.vmem %s1, %s234
      %s236 = smul.u32 48, %s19
      %s237 = smul.u32 20, %s18
      %p238 = scmp.lt.s32.totalorder %s237, 39
      %s239 = scalar_select %p238, %s237, 39
      %s240 = smul.addr %s239, 8
      %s241 = scalar_lea.vmem %s2, %s240
      %s242 = smul.u32 20, %s18
      %s243 = smul.u32 20, %s18
      %p244 = scmp.lt.s32.totalorder %s243, 39
      %s245 = scalar_select %p244, %s243, 39
      %s246 = smul.addr %s245, 8
      %s247 = scalar_lea.vmem %s3, %s246
      %s248 = smul.u32 20, %s18
      %p250 = scmp.eq.s32.totalorder %s19, 0
      // Predicated region
      $region33: #{graph_convolution.1} parent=31 // pred_check
        %p251 = pneg %p250
      $region34: #{graph_convolution.1} parent=31 // pred_check_branch
        %253 = sbr.rel (%p251) target = $region36
      $region35: #{graph_convolution.1} parent=31 // pred_region
        %254 = vst [vmem:[#allocation2] sm:$0xff] 0.0
        %255 = vst [vmem:[#allocation2 + $0x8] sm:$0xff] 0.0
        %256 = vst [vmem:[#allocation2 + $0x10] sm:$0xff] 0.0
        %257 = vst [vmem:[#allocation2 + $0x18] sm:$0xff] 0.0
        %258 = vst [vmem:[#allocation2 + $0x20] sm:$0xff] 0.0
        %259 = vst [vmem:[#allocation2 + $0x28] sm:$0xff] 0.0
        %260 = vst [vmem:[#allocation2 + $0x30] sm:$0xff] 0.0
        %261 = vst [vmem:[#allocation2 + $0x38] sm:$0xff] 0.0
        %262 = vst [vmem:[#allocation2 + $0x40] sm:$0xff] 0.0
        %263 = vst [vmem:[#allocation2 + $0x48] sm:$0xff] 0.0
        %264 = vst [vmem:[#allocation2 + $0x50] sm:$0xff] 0.0
        %265 = vst [vmem:[#allocation2 + $0x58] sm:$0xff] 0.0
        %266 = vst [vmem:[#allocation2 + $0x60] sm:$0xff] 0.0
        %267 = vst [vmem:[#allocation2 + $0x68] sm:$0xff] 0.0
        %268 = vst [vmem:[#allocation2 + $0x70] sm:$0xff] 0.0
        %269 = vst [vmem:[#allocation2 + $0x78] sm:$0xff] 0.0
        %270 = vst [vmem:[#allocation2 + $0x80] sm:$0xff] 0.0
        %271 = vst [vmem:[#allocation2 + $0x88] sm:$0xff] 0.0
        %272 = vst [vmem:[#allocation2 + $0x90] sm:$0xff] 0.0
        %273 = vst [vmem:[#allocation2 + $0x98] sm:$0xff] 0.0
        %vm274 = vcmask 7168
        %275 = vst.msk [vmem:[#allocation3] sm:$0xff] %vm274, 0.0
        %276 = vst.msk [vmem:[#allocation3 + $0x8] sm:$0xff] %vm274, 0.0
        %277 = vst.msk [vmem:[#allocation3 + $0x10] sm:$0xff] %vm274, 0.0
        %278 = vst.msk [vmem:[#allocation3 + $0x18] sm:$0xff] %vm274, 0.0
        %279 = vst.msk [vmem:[#allocation3 + $0x20] sm:$0xff] %vm274, 0.0
        %280 = vst.msk [vmem:[#allocation3 + $0x28] sm:$0xff] %vm274, 0.0
        %281 = vst.msk [vmem:[#allocation3 + $0x30] sm:$0xff] %vm274, 0.0
        %282 = vst.msk [vmem:[#allocation3 + $0x38] sm:$0xff] %vm274, 0.0
        %283 = vst.msk [vmem:[#allocation3 + $0x40] sm:$0xff] %vm274, 0.0
        %284 = vst.msk [vmem:[#allocation3 + $0x48] sm:$0xff] %vm274, 0.0
        %285 = vst.msk [vmem:[#allocation3 + $0x50] sm:$0xff] %vm274, 0.0
        %286 = vst.msk [vmem:[#allocation3 + $0x58] sm:$0xff] %vm274, 0.0
        %287 = vst.msk [vmem:[#allocation3 + $0x60] sm:$0xff] %vm274, 0.0
        %288 = vst.msk [vmem:[#allocation3 + $0x68] sm:$0xff] %vm274, 0.0
        %289 = vst.msk [vmem:[#allocation3 + $0x70] sm:$0xff] %vm274, 0.0
        %290 = vst.msk [vmem:[#allocation3 + $0x78] sm:$0xff] %vm274, 0.0
        %291 = vst.msk [vmem:[#allocation3 + $0x80] sm:$0xff] %vm274, 0.0
        %292 = vst.msk [vmem:[#allocation3 + $0x88] sm:$0xff] %vm274, 0.0
        %293 = vst.msk [vmem:[#allocation3 + $0x90] sm:$0xff] %vm274, 0.0
        %294 = vst.msk [vmem:[#allocation3 + $0x98] sm:$0xff] %vm274, 0.0
      $region36: #{graph_convolution.1} parent=31 // pred_fallthru
        _
      %v295 = vld [vmem:[%s228] sm:$0xff]
      %v296 = vld [vmem:[%s228 + $0x8] sm:$0xf]
      %v297 = vld [vmem:[%s228 + $0xc] sm:$0xff]
      %v298 = vld [vmem:[%s228 + $0x14] sm:$0xf]
      %v299 = vld [vmem:[%s228 + $0x18] sm:$0xff]
      %v300 = vld [vmem:[%s228 + $0x20] sm:$0xf]
      %v301 = vld [vmem:[%s228 + $0x24] sm:$0xff]
      %v302 = vld [vmem:[%s228 + $0x2c] sm:$0xf]
      %v303 = vld [vmem:[%s228 + $0x30] sm:$0xff]
      %v304 = vld [vmem:[%s228 + $0x38] sm:$0xf]
      %v305 = vld [vmem:[%s228 + $0x3c] sm:$0xff]
      %v306 = vld [vmem:[%s228 + $0x44] sm:$0xf]
      %v307 = vld [vmem:[%s228 + $0x48] sm:$0xff]
      %v308 = vld [vmem:[%s228 + $0x50] sm:$0xf]
      %v309 = vld [vmem:[%s228 + $0x54] sm:$0xff]
      %v310 = vld [vmem:[%s228 + $0x5c] sm:$0xf]
      %v311 = vld [vmem:[%s228 + $0x60] sm:$0xff]
      %v312 = vld [vmem:[%s228 + $0x68] sm:$0xf]
      %v313 = vld [vmem:[%s228 + $0x6c] sm:$0xff]
      %v314 = vld [vmem:[%s228 + $0x74] sm:$0xf]
      %v315 = vld [vmem:[%s228 + $0x78] sm:$0xff]
      %v316 = vld [vmem:[%s228 + $0x80] sm:$0xf]
      %v317 = vld [vmem:[%s228 + $0x84] sm:$0xff]
      %v318 = vld [vmem:[%s228 + $0x8c] sm:$0xf]
      %v319 = vld [vmem:[%s228 + $0x90] sm:$0xff]
      %v320 = vld [vmem:[%s228 + $0x98] sm:$0xf]
      %v321 = vld [vmem:[%s228 + $0x9c] sm:$0xff]
      %v322 = vld [vmem:[%s228 + $0xa4] sm:$0xf]
      %v323 = vld [vmem:[%s228 + $0xa8] sm:$0xff]
      %v324 = vld [vmem:[%s228 + $0xb0] sm:$0xf]
      %v325 = vld [vmem:[%s228 + $0xb4] sm:$0xff]
      %v326 = vld [vmem:[%s228 + $0xbc] sm:$0xf]
      %v327 = vld [vmem:[%s228 + $0xc0] sm:$0xff]
      %v328 = vld [vmem:[%s228 + $0xc8] sm:$0xf]
      %v329 = vld [vmem:[%s228 + $0xcc] sm:$0xff]
      %v330 = vld [vmem:[%s228 + $0xd4] sm:$0xf]
      %v331 = vld [vmem:[%s228 + $0xd8] sm:$0xff]
      %v332 = vld [vmem:[%s228 + $0xe0] sm:$0xf]
      %v333 = vld [vmem:[%s228 + $0xe4] sm:$0xff]
      %v334 = vld [vmem:[%s228 + $0xec] sm:$0xf]
      %v335 = vld [vmem:[#allocation2] sm:$0xff]
      %v336 = vld [vmem:[#allocation2 + $0x8] sm:$0xff]
      %v337 = vld [vmem:[#allocation2 + $0x10] sm:$0xff]
      %v338 = vld [vmem:[#allocation2 + $0x18] sm:$0xff]
      %v339 = vld [vmem:[#allocation2 + $0x20] sm:$0xff]
      %v340 = vld [vmem:[#allocation2 + $0x28] sm:$0xff]
      %v341 = vld [vmem:[#allocation2 + $0x30] sm:$0xff]
      %v342 = vld [vmem:[#allocation2 + $0x38] sm:$0xff]
      %v343 = vld [vmem:[#allocation2 + $0x40] sm:$0xff]
      %v344 = vld [vmem:[#allocation2 + $0x48] sm:$0xff]
      %v345 = vld [vmem:[#allocation2 + $0x50] sm:$0xff]
      %v346 = vld [vmem:[#allocation2 + $0x58] sm:$0xff]
      %v347 = vld [vmem:[#allocation2 + $0x60] sm:$0xff]
      %v348 = vld [vmem:[#allocation2 + $0x68] sm:$0xff]
      %v349 = vld [vmem:[#allocation2 + $0x70] sm:$0xff]
      %v350 = vld [vmem:[#allocation2 + $0x78] sm:$0xff]
      %v351 = vld [vmem:[#allocation2 + $0x80] sm:$0xff]
      %v352 = vld [vmem:[#allocation2 + $0x88] sm:$0xff]
      %v353 = vld [vmem:[#allocation2 + $0x90] sm:$0xff]
      %v354 = vld [vmem:[#allocation2 + $0x98] sm:$0xff]
      %v355 = vld [vmem:[%s235] sm:$0xf]
      %v356 = vld [vmem:[%s235 + $0x4] sm:$0xf]
      %v357 = vld [vmem:[%s235 + $0x8] sm:$0xf]
      %v358 = vld [vmem:[%s235 + $0xc] sm:$0xf]
      %v359 = vld [vmem:[%s235 + $0x10] sm:$0xf]
      %v360 = vld [vmem:[%s235 + $0x14] sm:$0xf]
      %v361 = vld [vmem:[%s235 + $0x18] sm:$0xf]
      %v362 = vld [vmem:[%s235 + $0x1c] sm:$0xf]
      %v363 = vld [vmem:[%s235 + $0x20] sm:$0xf]
      %v364 = vld [vmem:[%s235 + $0x24] sm:$0xf]
      %v365 = vld [vmem:[%s235 + $0x28] sm:$0xf]
      %v366 = vld [vmem:[%s235 + $0x2c] sm:$0xf]
      %v367 = vld [vmem:[%s235 + $0x30] sm:$0xf]
      %v368 = vld [vmem:[%s235 + $0x34] sm:$0xf]
      %v369 = vld [vmem:[%s235 + $0x38] sm:$0xf]
      %v370 = vld [vmem:[%s235 + $0x3c] sm:$0xf]
      %v371 = vld [vmem:[%s235 + $0x40] sm:$0xf]
      %v372 = vld [vmem:[%s235 + $0x44] sm:$0xf]
      %v373 = vld [vmem:[%s235 + $0x48] sm:$0xf]
      %v374 = vld [vmem:[%s235 + $0x4c] sm:$0xf]
      %v375 = vld [vmem:[%s235 + $0x50] sm:$0xf]
      %v376 = vld [vmem:[%s235 + $0x54] sm:$0xf]
      %v377 = vld [vmem:[%s235 + $0x58] sm:$0xf]
      %v378 = vld [vmem:[%s235 + $0x5c] sm:$0xf]
      %v379 = vld [vmem:[%s235 + $0x60] sm:$0xf]
      %v380 = vld [vmem:[%s235 + $0x64] sm:$0xf]
      %v381 = vld [vmem:[%s235 + $0x68] sm:$0xf]
      %v382 = vld [vmem:[%s235 + $0x6c] sm:$0xf]
      %v383 = vld [vmem:[%s235 + $0x70] sm:$0xf]
      %v384 = vld [vmem:[%s235 + $0x74] sm:$0xf]
      %v385 = vld [vmem:[%s235 + $0x78] sm:$0xf]
      %v386 = vld [vmem:[%s235 + $0x7c] sm:$0xf]
      %v387 = vld [vmem:[%s235 + $0x80] sm:$0xf]
      %v388 = vld [vmem:[%s235 + $0x84] sm:$0xf]
      %v389 = vld [vmem:[%s235 + $0x88] sm:$0xf]
      %v390 = vld [vmem:[%s235 + $0x8c] sm:$0xf]
      %v391 = vld [vmem:[%s235 + $0x90] sm:$0xf]
      %v392 = vld [vmem:[%s235 + $0x94] sm:$0xf]
      %v393 = vld [vmem:[%s235 + $0x98] sm:$0xf]
      %v394 = vld [vmem:[%s235 + $0x9c] sm:$0xf]
      %v395 = vld [vmem:[%s235 + $0xa0] sm:$0xf]
      %v396 = vld [vmem:[%s235 + $0xa4] sm:$0xf]
      %v397 = vld [vmem:[%s235 + $0xa8] sm:$0xf]
      %v398 = vld [vmem:[%s235 + $0xac] sm:$0xf]
      %v399 = vld [vmem:[%s235 + $0xb0] sm:$0xf]
      %v400 = vld [vmem:[%s235 + $0xb4] sm:$0xf]
      %v401 = vld [vmem:[%s235 + $0xb8] sm:$0xf]
      %v402 = vld [vmem:[%s235 + $0xbc] sm:$0xf]
      %v443 = vunpack.c.l.b16 %v295
      %v444 = vunpack.c.h.b16 %v295
      %v445 = vunpack.c.l.b16 %v296
      %v446 = vunpack.c.l.b16 %v297
      %v447 = vunpack.c.h.b16 %v297
      %v448 = vunpack.c.l.b16 %v298
      %v449 = vunpack.c.l.b16 %v299
      %v450 = vunpack.c.h.b16 %v299
      %v451 = vunpack.c.l.b16 %v300
      %v452 = vunpack.c.l.b16 %v301
      %v453 = vunpack.c.h.b16 %v301
      %v454 = vunpack.c.l.b16 %v302
      %v455 = vunpack.c.l.b16 %v303
      %v456 = vunpack.c.h.b16 %v303
      %v457 = vunpack.c.l.b16 %v304
      %v458 = vunpack.c.l.b16 %v305
      %v459 = vunpack.c.h.b16 %v305
      %v460 = vunpack.c.l.b16 %v306
      %v461 = vunpack.c.l.b16 %v307
      %v462 = vunpack.c.h.b16 %v307
      %v463 = vunpack.c.l.b16 %v308
      %v464 = vunpack.c.l.b16 %v309
      %v465 = vunpack.c.h.b16 %v309
      %v466 = vunpack.c.l.b16 %v310
      %v467 = vunpack.c.l.b16 %v311
      %v468 = vunpack.c.h.b16 %v311
      %v469 = vunpack.c.l.b16 %v312
      %v470 = vunpack.c.l.b16 %v313
      %v471 = vunpack.c.h.b16 %v313
      %v472 = vunpack.c.l.b16 %v314
      %v473 = vunpack.c.l.b16 %v315
      %v474 = vunpack.c.h.b16 %v315
      %v475 = vunpack.c.l.b16 %v316
      %v476 = vunpack.c.l.b16 %v317
      %v477 = vunpack.c.h.b16 %v317
      %v478 = vunpack.c.l.b16 %v318
      %v479 = vunpack.c.l.b16 %v319
      %v480 = vunpack.c.h.b16 %v319
      %v481 = vunpack.c.l.b16 %v320
      %v482 = vunpack.c.l.b16 %v321
      %v483 = vunpack.c.h.b16 %v321
      %v484 = vunpack.c.l.b16 %v322
      %v485 = vunpack.c.l.b16 %v323
      %v486 = vunpack.c.h.b16 %v323
      %v487 = vunpack.c.l.b16 %v324
      %v488 = vunpack.c.l.b16 %v325
      %v489 = vunpack.c.h.b16 %v325
      %v490 = vunpack.c.l.b16 %v326
      %v491 = vunpack.c.l.b16 %v327
      %v492 = vunpack.c.h.b16 %v327
      %v493 = vunpack.c.l.b16 %v328
      %v494 = vunpack.c.l.b16 %v329
      %v495 = vunpack.c.h.b16 %v329
      %v496 = vunpack.c.l.b16 %v330
      %v497 = vunpack.c.l.b16 %v331
      %v498 = vunpack.c.h.b16 %v331
      %v499 = vunpack.c.l.b16 %v332
      %v500 = vunpack.c.l.b16 %v333
      %v501 = vunpack.c.h.b16 %v333
      %v502 = vunpack.c.l.b16 %v334
      %v503 = vpack.c.b16 %v446, %v443
      %v504 = vpack.c.b16 %v447, %v444
      %v505 = vpack.c.b16 %v448, %v445
      %v506 = vpack.c.b16 %v452, %v449
      %v507 = vpack.c.b16 %v453, %v450
      %v508 = vpack.c.b16 %v454, %v451
      %v509 = vpack.c.b16 %v458, %v455
      %v510 = vpack.c.b16 %v459, %v456
      %v511 = vpack.c.b16 %v460, %v457
      %v512 = vpack.c.b16 %v464, %v461
      %v513 = vpack.c.b16 %v465, %v462
      %v514 = vpack.c.b16 %v466, %v463
      %v515 = vpack.c.b16 %v470, %v467
      %v516 = vpack.c.b16 %v471, %v468
      %v517 = vpack.c.b16 %v472, %v469
      %v518 = vpack.c.b16 %v476, %v473
      %v519 = vpack.c.b16 %v477, %v474
      %v520 = vpack.c.b16 %v478, %v475
      %v521 = vpack.c.b16 %v482, %v479
      %v522 = vpack.c.b16 %v483, %v480
      %v523 = vpack.c.b16 %v484, %v481
      %v524 = vpack.c.b16 %v488, %v485
      %v525 = vpack.c.b16 %v489, %v486
      %v526 = vpack.c.b16 %v490, %v487
      %v527 = vpack.c.b16 %v494, %v491
      %v528 = vpack.c.b16 %v495, %v492
      %v529 = vpack.c.b16 %v496, %v493
      %v530 = vpack.c.b16 %v500, %v497
      %v531 = vpack.c.b16 %v501, %v498
      %v532 = vpack.c.b16 %v502, %v499
      %v611 = vunpack.c.l.b16 %v355
      %v612 = vunpack.c.l.b16 %v356
      %v613 = vunpack.c.l.b16 %v357
      %v614 = vunpack.c.l.b16 %v358
      %v615 = vunpack.c.l.b16 %v359
      %v616 = vunpack.c.l.b16 %v360
      %v617 = vunpack.c.l.b16 %v361
      %v618 = vunpack.c.l.b16 %v362
      %v619 = vunpack.c.l.b16 %v363
      %v620 = vunpack.c.l.b16 %v364
      %v621 = vunpack.c.l.b16 %v365
      %v622 = vunpack.c.l.b16 %v366
      %v623 = vunpack.c.l.b16 %v367
      %v624 = vunpack.c.l.b16 %v368
      %v625 = vunpack.c.l.b16 %v369
      %v626 = vunpack.c.l.b16 %v370
      %v627 = vunpack.c.l.b16 %v371
      %v628 = vunpack.c.l.b16 %v372
      %v629 = vunpack.c.l.b16 %v373
      %v630 = vunpack.c.l.b16 %v374
      %v631 = vunpack.c.l.b16 %v375
      %v632 = vunpack.c.l.b16 %v376
      %v633 = vunpack.c.l.b16 %v377
      %v634 = vunpack.c.l.b16 %v378
      %v635 = vunpack.c.l.b16 %v379
      %v636 = vunpack.c.l.b16 %v380
      %v637 = vunpack.c.l.b16 %v381
      %v638 = vunpack.c.l.b16 %v382
      %v639 = vunpack.c.l.b16 %v383
      %v640 = vunpack.c.l.b16 %v384
      %v641 = vunpack.c.l.b16 %v385
      %v642 = vunpack.c.l.b16 %v386
      %v643 = vunpack.c.l.b16 %v387
      %v644 = vunpack.c.l.b16 %v388
      %v645 = vunpack.c.l.b16 %v389
      %v646 = vunpack.c.l.b16 %v390
      %v647 = vunpack.c.l.b16 %v391
      %v648 = vunpack.c.l.b16 %v392
      %v649 = vunpack.c.l.b16 %v393
      %v650 = vunpack.c.l.b16 %v394
      %v651 = vunpack.c.l.b16 %v395
      %v652 = vunpack.c.l.b16 %v396
      %v653 = vunpack.c.l.b16 %v397
      %v654 = vunpack.c.l.b16 %v398
      %v655 = vunpack.c.l.b16 %v399
      %v656 = vunpack.c.l.b16 %v400
      %v657 = vunpack.c.l.b16 %v401
      %v658 = vunpack.c.l.b16 %v402
      %v659 = vpack.c.b16 %v612, %v611
      %v660 = vpack.c.b16 %v614, %v613
      %v661 = vpack.c.b16 %v616, %v615
      %v662 = vpack.c.b16 %v618, %v617
      %v663 = vpack.c.b16 %v620, %v619
      %v664 = vpack.c.b16 %v622, %v621
      %v665 = vpack.c.b16 %v624, %v623
      %v666 = vpack.c.b16 %v626, %v625
      %v667 = vpack.c.b16 %v628, %v627
      %v668 = vpack.c.b16 %v630, %v629
      %v669 = vpack.c.b16 %v632, %v631
      %v670 = vpack.c.b16 %v634, %v633
      %v671 = vpack.c.b16 %v636, %v635
      %v672 = vpack.c.b16 %v638, %v637
      %v673 = vpack.c.b16 %v640, %v639
      %v674 = vpack.c.b16 %v642, %v641
      %v675 = vpack.c.b16 %v644, %v643
      %v676 = vpack.c.b16 %v646, %v645
      %v677 = vpack.c.b16 %v648, %v647
      %v678 = vpack.c.b16 %v650, %v649
      %v679 = vpack.c.b16 %v652, %v651
      %v680 = vpack.c.b16 %v654, %v653
      %v681 = vpack.c.b16 %v656, %v655
      %v682 = vpack.c.b16 %v658, %v657
      %707 = vmatprep.subr.bf16.mxu0 0
      %708 = vmatpush1.bf16.msra.mxu0 %v666
      %709 = vmatprep.subr.bf16.mxu0 0
      %710 = vmatpush1.bf16.msra.mxu0 %v665
      %711 = vmatprep.subr.bf16.mxu0 0
      %712 = vmatpush1.bf16.msra.mxu0 %v664
      %713 = vmatprep.subr.bf16.mxu0 0
      %714 = vmatpush1.bf16.msra.mxu0 %v663
      %715 = vmatprep.subr.bf16.mxu0 0
      %716 = vmatpush1.bf16.msra.mxu0 %v662
      %717 = vmatprep.subr.bf16.mxu0 0
      %718 = vmatpush1.bf16.msra.mxu0 %v661
      %719 = vmatprep.subr.bf16.mxu0 0
      %720 = vmatpush1.bf16.msra.mxu0 %v660
      %721 = vmatprep.subr.bf16.mxu0 0
      %722 = vmatpush1.bf16.msra.mxu0 %v659
      %723 = vmatprep.subr.bf16.mxu0 0
      %724 = vmatpush2.bf16.msra.mxu0 %v674
      %725 = vmatprep.subr.bf16.mxu0 0
      %726 = vmatpush2.bf16.msra.mxu0 %v673
      %727 = vmatprep.subr.bf16.mxu0 0
      %728 = vmatpush2.bf16.msra.mxu0 %v672
      %729 = vmatprep.subr.bf16.mxu0 0
      %730 = vmatpush2.bf16.msra.mxu0 %v671
      %731 = vmatprep.subr.bf16.mxu0 0
      %732 = vmatpush2.bf16.msra.mxu0 %v670
      %733 = vmatprep.subr.bf16.mxu0 0
      %734 = vmatpush2.bf16.msra.mxu0 %v669
      %735 = vmatprep.subr.bf16.mxu0 0
      %736 = vmatpush2.bf16.msra.mxu0 %v668
      %737 = vmatprep.subr.bf16.mxu0 0
      %738 = vmatpush2.bf16.msra.mxu0 %v667
      %739 = vmatprep.mubr.bf16.mxu0 %v504
      %740 = vmatmul.mubr.bf16.gmra.mxu0 %v503
      %v741 = vpop.f32.mrf.mxu0
      %v742 = vadd.f32 0.0, %v741
      %v743 = vpop.f32.mrf.mxu0
      %v744 = vpop.f32.mrf.mxu0
      %v745 = vadd.f32 0.0, %v744
      %v746 = vpop.f32.mrf.mxu0
      %747 = vmatprep.mubr.bf16.mxu0 %v507
      %748 = vmatmul.mubr.bf16.gmra.mxu0 %v506
      %v749 = vpop.f32.mrf.mxu0
      %v750 = vadd.f32 0.0, %v749
      %v751 = vpop.f32.mrf.mxu0
      %v752 = vpop.f32.mrf.mxu0
      %v753 = vadd.f32 0.0, %v752
      %v754 = vpop.f32.mrf.mxu0
      %755 = vmatprep.mubr.bf16.mxu0 %v510
      %756 = vmatmul.mubr.bf16.gmra.mxu0 %v509
      %v757 = vpop.f32.mrf.mxu0
      %v758 = vadd.f32 0.0, %v757
      %v759 = vpop.f32.mrf.mxu0
      %v760 = vpop.f32.mrf.mxu0
      %v761 = vadd.f32 0.0, %v760
      %v762 = vpop.f32.mrf.mxu0
      %763 = vmatprep.mubr.bf16.mxu0 %v513
      %764 = vmatmul.mubr.bf16.gmra.mxu0 %v512
      %v765 = vpop.f32.mrf.mxu0
      %v766 = vadd.f32 0.0, %v765
      %v767 = vpop.f32.mrf.mxu0
      %v768 = vpop.f32.mrf.mxu0
      %v769 = vadd.f32 0.0, %v768
      %v770 = vpop.f32.mrf.mxu0
      %771 = vmatprep.mubr.bf16.mxu0 %v516
      %772 = vmatmul.mubr.bf16.gmra.mxu0 %v515
      %v773 = vpop.f32.mrf.mxu0
      %v774 = vadd.f32 0.0, %v773
      %v775 = vpop.f32.mrf.mxu0
      %v776 = vpop.f32.mrf.mxu0
      %v777 = vadd.f32 0.0, %v776
      %v778 = vpop.f32.mrf.mxu0
      %779 = vmatprep.mubr.bf16.mxu0 %v519
      %780 = vmatmul.mubr.bf16.gmra.mxu0 %v518
      %v781 = vpop.f32.mrf.mxu0
      %v782 = vadd.f32 0.0, %v781
      %v783 = vpop.f32.mrf.mxu0
      %v784 = vpop.f32.mrf.mxu0
      %v785 = vadd.f32 0.0, %v784
      %v786 = vpop.f32.mrf.mxu0
      %787 = vmatprep.mubr.bf16.mxu0 %v522
      %788 = vmatmul.mubr.bf16.gmra.mxu0 %v521
      %v789 = vpop.f32.mrf.mxu0
      %v790 = vadd.f32 0.0, %v789
      %v791 = vpop.f32.mrf.mxu0
      %v792 = vpop.f32.mrf.mxu0
      %v793 = vadd.f32 0.0, %v792
      %v794 = vpop.f32.mrf.mxu0
      %795 = vmatprep.mubr.bf16.mxu0 %v525
      %796 = vmatmul.mubr.bf16.gmra.mxu0 %v524
      %v797 = vpop.f32.mrf.mxu0
      %v798 = vadd.f32 0.0, %v797
      %v799 = vpop.f32.mrf.mxu0
      %v800 = vpop.f32.mrf.mxu0
      %v801 = vadd.f32 0.0, %v800
      %v802 = vpop.f32.mrf.mxu0
      %803 = vmatprep.mubr.bf16.mxu0 %v528
      %804 = vmatmul.mubr.bf16.gmra.mxu0 %v527
      %v805 = vpop.f32.mrf.mxu0
      %v806 = vadd.f32 0.0, %v805
      %v807 = vpop.f32.mrf.mxu0
      %v808 = vpop.f32.mrf.mxu0
      %v809 = vadd.f32 0.0, %v808
      %v810 = vpop.f32.mrf.mxu0
      %811 = vmatprep.mubr.bf16.mxu0 %v531
      %812 = vmatmul.mubr.bf16.gmra.mxu0 %v530
      %v813 = vpop.f32.mrf.mxu0
      %v814 = vadd.f32 0.0, %v813
      %v815 = vpop.f32.mrf.mxu0
      %v816 = vpop.f32.mrf.mxu0
      %v817 = vadd.f32 0.0, %v816
      %v818 = vpop.f32.mrf.mxu0
      %819 = vdwg.mxu0
      %820 = vmatprep.subr.bf16.mxu0 0
      %821 = vmatpush1.bf16.msra.mxu0 %v682
      %822 = vmatprep.subr.bf16.mxu0 0
      %823 = vmatpush1.bf16.msra.mxu0 %v681
      %824 = vmatprep.subr.bf16.mxu0 0
      %825 = vmatpush1.bf16.msra.mxu0 %v680
      %826 = vmatprep.subr.bf16.mxu0 0
      %827 = vmatpush1.bf16.msra.mxu0 %v679
      %828 = vmatprep.subr.bf16.mxu0 0
      %829 = vmatpush1.bf16.msra.mxu0 %v678
      %830 = vmatprep.subr.bf16.mxu0 0
      %831 = vmatpush1.bf16.msra.mxu0 %v677
      %832 = vmatprep.subr.bf16.mxu0 0
      %833 = vmatpush1.bf16.msra.mxu0 %v676
      %834 = vmatprep.subr.bf16.mxu0 0
      %835 = vmatpush1.bf16.msra.mxu0 %v675
      %836 = vmatprep.subr.bf16.mxu0 0
      %837 = vmatpush2.bf16.msra.mxu0 0
      %838 = vmatprep.subr.bf16.mxu0 0
      %839 = vmatpush2.bf16.msra.mxu0 0
      %840 = vmatprep.subr.bf16.mxu0 0
      %841 = vmatpush2.bf16.msra.mxu0 0
      %842 = vmatprep.subr.bf16.mxu0 0
      %843 = vmatpush2.bf16.msra.mxu0 0
      %844 = vmatprep.subr.bf16.mxu0 0
      %845 = vmatpush2.bf16.msra.mxu0 0
      %846 = vmatprep.subr.bf16.mxu0 0
      %847 = vmatpush2.bf16.msra.mxu0 0
      %848 = vmatprep.subr.bf16.mxu0 0
      %849 = vmatpush2.bf16.msra.mxu0 0
      %850 = vmatprep.subr.bf16.mxu0 0
      %851 = vmatpush2.bf16.msra.mxu0 0
      %852 = vmatprep.mubr.bf16.mxu0 0
      %853 = vmatmul.mubr.bf16.gmra.mxu0 %v505
      %v854 = vpop.f32.mrf.mxu0
      %v855 = vadd.f32 %v742, %v854
      %v856 = vpop.f32.mrf.mxu0
      %v857 = vpop.f32.mrf.mxu0
      %v858 = vadd.f32 %v745, %v857
      %v859 = vpop.f32.mrf.mxu0
      %860 = vmatprep.mubr.bf16.mxu0 0
      %861 = vmatmul.mubr.bf16.gmra.mxu0 %v508
      %v862 = vpop.f32.mrf.mxu0
      %v863 = vadd.f32 %v750, %v862
      %v864 = vpop.f32.mrf.mxu0
      %v865 = vpop.f32.mrf.mxu0
      %v866 = vadd.f32 %v753, %v865
      %v867 = vpop.f32.mrf.mxu0
      %868 = vmatprep.mubr.bf16.mxu0 0
      %869 = vmatmul.mubr.bf16.gmra.mxu0 %v511
      %v870 = vpop.f32.mrf.mxu0
      %v871 = vadd.f32 %v758, %v870
      %v872 = vpop.f32.mrf.mxu0
      %v873 = vpop.f32.mrf.mxu0
      %v874 = vadd.f32 %v761, %v873
      %v875 = vpop.f32.mrf.mxu0
      %876 = vmatprep.mubr.bf16.mxu0 0
      %877 = vmatmul.mubr.bf16.gmra.mxu0 %v514
      %v878 = vpop.f32.mrf.mxu0
      %v879 = vadd.f32 %v766, %v878
      %v880 = vpop.f32.mrf.mxu0
      %v881 = vpop.f32.mrf.mxu0
      %v882 = vadd.f32 %v769, %v881
      %v883 = vpop.f32.mrf.mxu0
      %884 = vmatprep.mubr.bf16.mxu0 0
      %885 = vmatmul.mubr.bf16.gmra.mxu0 %v517
      %v886 = vpop.f32.mrf.mxu0
      %v887 = vadd.f32 %v774, %v886
      %v888 = vpop.f32.mrf.mxu0
      %v889 = vpop.f32.mrf.mxu0
      %v890 = vadd.f32 %v777, %v889
      %v891 = vpop.f32.mrf.mxu0
      %892 = vmatprep.mubr.bf16.mxu0 0
      %893 = vmatmul.mubr.bf16.gmra.mxu0 %v520
      %v894 = vpop.f32.mrf.mxu0
      %v895 = vadd.f32 %v782, %v894
      %v896 = vpop.f32.mrf.mxu0
      %v897 = vpop.f32.mrf.mxu0
      %v898 = vadd.f32 %v785, %v897
      %v899 = vpop.f32.mrf.mxu0
      %900 = vmatprep.mubr.bf16.mxu0 0
      %901 = vmatmul.mubr.bf16.gmra.mxu0 %v523
      %v902 = vpop.f32.mrf.mxu0
      %v903 = vadd.f32 %v790, %v902
      %v904 = vpop.f32.mrf.mxu0
      %v905 = vpop.f32.mrf.mxu0
      %v906 = vadd.f32 %v793, %v905
      %v907 = vpop.f32.mrf.mxu0
      %908 = vmatprep.mubr.bf16.mxu0 0
      %909 = vmatmul.mubr.bf16.gmra.mxu0 %v526
      %v910 = vpop.f32.mrf.mxu0
      %v911 = vadd.f32 %v798, %v910
      %v912 = vpop.f32.mrf.mxu0
      %v913 = vpop.f32.mrf.mxu0
      %v914 = vadd.f32 %v801, %v913
      %v915 = vpop.f32.mrf.mxu0
      %916 = vmatprep.mubr.bf16.mxu0 0
      %917 = vmatmul.mubr.bf16.gmra.mxu0 %v529
      %v918 = vpop.f32.mrf.mxu0
      %v919 = vadd.f32 %v806, %v918
      %v920 = vpop.f32.mrf.mxu0
      %v921 = vpop.f32.mrf.mxu0
      %v922 = vadd.f32 %v809, %v921
      %v923 = vpop.f32.mrf.mxu0
      %924 = vmatprep.mubr.bf16.mxu0 0
      %925 = vmatmul.mubr.bf16.gmra.mxu0 %v532
      %v926 = vpop.f32.mrf.mxu0
      %v927 = vadd.f32 %v814, %v926
      %v928 = vpop.f32.mrf.mxu0
      %v929 = vpop.f32.mrf.mxu0
      %v930 = vadd.f32 %v817, %v929
      %v931 = vpop.f32.mrf.mxu0
      %932 = vdwg.mxu0
      %v933 = vadd.f32 %v335, %v855
      %v934 = vadd.f32 %v336, %v858
      %v935 = vadd.f32 %v337, %v863
      %v936 = vadd.f32 %v338, %v866
      %v937 = vadd.f32 %v339, %v871
      %v938 = vadd.f32 %v340, %v874
      %v939 = vadd.f32 %v341, %v879
      %v940 = vadd.f32 %v342, %v882
      %v941 = vadd.f32 %v343, %v887
      %v942 = vadd.f32 %v344, %v890
      %v943 = vadd.f32 %v345, %v895
      %v944 = vadd.f32 %v346, %v898
      %v945 = vadd.f32 %v347, %v903
      %v946 = vadd.f32 %v348, %v906
      %v947 = vadd.f32 %v349, %v911
      %v948 = vadd.f32 %v350, %v914
      %v949 = vadd.f32 %v351, %v919
      %v950 = vadd.f32 %v352, %v922
      %v951 = vadd.f32 %v353, %v927
      %v952 = vadd.f32 %v354, %v930
      %953 = vst [vmem:[#allocation2] sm:$0xff] %v933
      %954 = vst [vmem:[#allocation2 + $0x8] sm:$0xff] %v934
      %955 = vst [vmem:[#allocation2 + $0x10] sm:$0xff] %v935
      %956 = vst [vmem:[#allocation2 + $0x18] sm:$0xff] %v936
      %957 = vst [vmem:[#allocation2 + $0x20] sm:$0xff] %v937
      %958 = vst [vmem:[#allocation2 + $0x28] sm:$0xff] %v938
      %959 = vst [vmem:[#allocation2 + $0x30] sm:$0xff] %v939
      %960 = vst [vmem:[#allocation2 + $0x38] sm:$0xff] %v940
      %961 = vst [vmem:[#allocation2 + $0x40] sm:$0xff] %v941
      %962 = vst [vmem:[#allocation2 + $0x48] sm:$0xff] %v942
      %963 = vst [vmem:[#allocation2 + $0x50] sm:$0xff] %v943
      %964 = vst [vmem:[#allocation2 + $0x58] sm:$0xff] %v944
      %965 = vst [vmem:[#allocation2 + $0x60] sm:$0xff] %v945
      %966 = vst [vmem:[#allocation2 + $0x68] sm:$0xff] %v946
      %967 = vst [vmem:[#allocation2 + $0x70] sm:$0xff] %v947
      %968 = vst [vmem:[#allocation2 + $0x78] sm:$0xff] %v948
      %969 = vst [vmem:[#allocation2 + $0x80] sm:$0xff] %v949
      %970 = vst [vmem:[#allocation2 + $0x88] sm:$0xff] %v950
      %971 = vst [vmem:[#allocation2 + $0x90] sm:$0xff] %v951
      %972 = vst [vmem:[#allocation2 + $0x98] sm:$0xff] %v952
      %v973 = vld [vmem:[#allocation3] sm:$0xff]
      %v974 = vld [vmem:[#allocation3 + $0x8] sm:$0xff]
      %v975 = vld [vmem:[#allocation3 + $0x10] sm:$0xff]
      %v976 = vld [vmem:[#allocation3 + $0x18] sm:$0xff]
      %v977 = vld [vmem:[#allocation3 + $0x20] sm:$0xff]
      %v978 = vld [vmem:[#allocation3 + $0x28] sm:$0xff]
      %v979 = vld [vmem:[#allocation3 + $0x30] sm:$0xff]
      %v980 = vld [vmem:[#allocation3 + $0x38] sm:$0xff]
      %v981 = vld [vmem:[#allocation3 + $0x40] sm:$0xff]
      %v982 = vld [vmem:[#allocation3 + $0x48] sm:$0xff]
      %v983 = vld [vmem:[#allocation3 + $0x50] sm:$0xff]
      %v984 = vld [vmem:[#allocation3 + $0x58] sm:$0xff]
      %v985 = vld [vmem:[#allocation3 + $0x60] sm:$0xff]
      %v986 = vld [vmem:[#allocation3 + $0x68] sm:$0xff]
      %v987 = vld [vmem:[#allocation3 + $0x70] sm:$0xff]
      %v988 = vld [vmem:[#allocation3 + $0x78] sm:$0xff]
      %v989 = vld [vmem:[#allocation3 + $0x80] sm:$0xff]
      %v990 = vld [vmem:[#allocation3 + $0x88] sm:$0xff]
      %v991 = vld [vmem:[#allocation3 + $0x90] sm:$0xff]
      %v992 = vld [vmem:[#allocation3 + $0x98] sm:$0xff]
      %v993 = vunpack.c.l.bf16 %v295
      %v994 = vunpack.c.h.bf16 %v295
      %v995 = vunpack.c.l.bf16 %v296
      %v996 = vunpack.c.l.bf16 %v297
      %v997 = vunpack.c.h.bf16 %v297
      %v998 = vunpack.c.l.bf16 %v298
      %v999 = vunpack.c.l.bf16 %v299
      %v1000 = vunpack.c.h.bf16 %v299
      %v1001 = vunpack.c.l.bf16 %v300
      %v1002 = vunpack.c.l.bf16 %v301
      %v1003 = vunpack.c.h.bf16 %v301
      %v1004 = vunpack.c.l.bf16 %v302
      %v1005 = vunpack.c.l.bf16 %v303
      %v1006 = vunpack.c.h.bf16 %v303
      %v1007 = vunpack.c.l.bf16 %v304
      %v1008 = vunpack.c.l.bf16 %v305
      %v1009 = vunpack.c.h.bf16 %v305
      %v1010 = vunpack.c.l.bf16 %v306
      %v1011 = vunpack.c.l.bf16 %v307
      %v1012 = vunpack.c.h.bf16 %v307
      %v1013 = vunpack.c.l.bf16 %v308
      %v1014 = vunpack.c.l.bf16 %v309
      %v1015 = vunpack.c.h.bf16 %v309
      %v1016 = vunpack.c.l.bf16 %v310
      %v1017 = vunpack.c.l.bf16 %v311
      %v1018 = vunpack.c.h.bf16 %v311
      %v1019 = vunpack.c.l.bf16 %v312
      %v1020 = vunpack.c.l.bf16 %v313
      %v1021 = vunpack.c.h.bf16 %v313
      %v1022 = vunpack.c.l.bf16 %v314
      %v1023 = vunpack.c.l.bf16 %v315
      %v1024 = vunpack.c.h.bf16 %v315
      %v1025 = vunpack.c.l.bf16 %v316
      %v1026 = vunpack.c.l.bf16 %v317
      %v1027 = vunpack.c.h.bf16 %v317
      %v1028 = vunpack.c.l.bf16 %v318
      %v1029 = vunpack.c.l.bf16 %v319
      %v1030 = vunpack.c.h.bf16 %v319
      %v1031 = vunpack.c.l.bf16 %v320
      %v1032 = vunpack.c.l.bf16 %v321
      %v1033 = vunpack.c.h.bf16 %v321
      %v1034 = vunpack.c.l.bf16 %v322
      %v1035 = vunpack.c.l.bf16 %v323
      %v1036 = vunpack.c.h.bf16 %v323
      %v1037 = vunpack.c.l.bf16 %v324
      %v1038 = vunpack.c.l.bf16 %v325
      %v1039 = vunpack.c.h.bf16 %v325
      %v1040 = vunpack.c.l.bf16 %v326
      %v1041 = vunpack.c.l.bf16 %v327
      %v1042 = vunpack.c.h.bf16 %v327
      %v1043 = vunpack.c.l.bf16 %v328
      %v1044 = vunpack.c.l.bf16 %v329
      %v1045 = vunpack.c.h.bf16 %v329
      %v1046 = vunpack.c.l.bf16 %v330
      %v1047 = vunpack.c.l.bf16 %v331
      %v1048 = vunpack.c.h.bf16 %v331
      %v1049 = vunpack.c.l.bf16 %v332
      %v1050 = vunpack.c.l.bf16 %v333
      %v1051 = vunpack.c.h.bf16 %v333
      %v1052 = vunpack.c.l.bf16 %v334
      %v1053 = vadd.f32 %v993, %v994
      %v1054 = vadd.f32 %v1053, %v995
      %1055 = vadd.xlane.f32.xlu0 %v1054
      %v1056 = vpop.xlane.xlu0 %1055
      %v1057 = vadd.f32 %v996, %v997
      %v1058 = vadd.f32 %v1057, %v998
      %1059 = vadd.xlane.f32.xlu0 %v1058
      %v1060 = vpop.xlane.xlu0 %1059
      %v1061 = vadd.f32 %v999, %v1000
      %v1062 = vadd.f32 %v1061, %v1001
      %1063 = vadd.xlane.f32.xlu0 %v1062
      %v1064 = vpop.xlane.xlu0 %1063
      %v1065 = vadd.f32 %v1002, %v1003
      %v1066 = vadd.f32 %v1065, %v1004
      %1067 = vadd.xlane.f32.xlu0 %v1066
      %v1068 = vpop.xlane.xlu0 %1067
      %v1069 = vadd.f32 %v1005, %v1006
      %v1070 = vadd.f32 %v1069, %v1007
      %1071 = vadd.xlane.f32.xlu0 %v1070
      %v1072 = vpop.xlane.xlu0 %1071
      %v1073 = vadd.f32 %v1008, %v1009
      %v1074 = vadd.f32 %v1073, %v1010
      %1075 = vadd.xlane.f32.xlu0 %v1074
      %v1076 = vpop.xlane.xlu0 %1075
      %v1077 = vadd.f32 %v1011, %v1012
      %v1078 = vadd.f32 %v1077, %v1013
      %1079 = vadd.xlane.f32.xlu0 %v1078
      %v1080 = vpop.xlane.xlu0 %1079
      %v1081 = vadd.f32 %v1014, %v1015
      %v1082 = vadd.f32 %v1081, %v1016
      %1083 = vadd.xlane.f32.xlu0 %v1082
      %v1084 = vpop.xlane.xlu0 %1083
      %v1085 = vadd.f32 %v1017, %v1018
      %v1086 = vadd.f32 %v1085, %v1019
      %1087 = vadd.xlane.f32.xlu0 %v1086
      %v1088 = vpop.xlane.xlu0 %1087
      %v1089 = vadd.f32 %v1020, %v1021
      %v1090 = vadd.f32 %v1089, %v1022
      %1091 = vadd.xlane.f32.xlu0 %v1090
      %v1092 = vpop.xlane.xlu0 %1091
      %v1093 = vadd.f32 %v1023, %v1024
      %v1094 = vadd.f32 %v1093, %v1025
      %1095 = vadd.xlane.f32.xlu0 %v1094
      %v1096 = vpop.xlane.xlu0 %1095
      %v1097 = vadd.f32 %v1026, %v1027
      %v1098 = vadd.f32 %v1097, %v1028
      %1099 = vadd.xlane.f32.xlu0 %v1098
      %v1100 = vpop.xlane.xlu0 %1099
      %v1101 = vadd.f32 %v1029, %v1030
      %v1102 = vadd.f32 %v1101, %v1031
      %1103 = vadd.xlane.f32.xlu0 %v1102
      %v1104 = vpop.xlane.xlu0 %1103
      %v1105 = vadd.f32 %v1032, %v1033
      %v1106 = vadd.f32 %v1105, %v1034
      %1107 = vadd.xlane.f32.xlu0 %v1106
      %v1108 = vpop.xlane.xlu0 %1107
      %v1109 = vadd.f32 %v1035, %v1036
      %v1110 = vadd.f32 %v1109, %v1037
      %1111 = vadd.xlane.f32.xlu0 %v1110
      %v1112 = vpop.xlane.xlu0 %1111
      %v1113 = vadd.f32 %v1038, %v1039
      %v1114 = vadd.f32 %v1113, %v1040
      %1115 = vadd.xlane.f32.xlu0 %v1114
      %v1116 = vpop.xlane.xlu0 %1115
      %v1117 = vadd.f32 %v1041, %v1042
      %v1118 = vadd.f32 %v1117, %v1043
      %1119 = vadd.xlane.f32.xlu0 %v1118
      %v1120 = vpop.xlane.xlu0 %1119
      %v1121 = vadd.f32 %v1044, %v1045
      %v1122 = vadd.f32 %v1121, %v1046
      %1123 = vadd.xlane.f32.xlu0 %v1122
      %v1124 = vpop.xlane.xlu0 %1123
      %v1125 = vadd.f32 %v1047, %v1048
      %v1126 = vadd.f32 %v1125, %v1049
      %1127 = vadd.xlane.f32.xlu0 %v1126
      %v1128 = vpop.xlane.xlu0 %1127
      %v1129 = vadd.f32 %v1050, %v1051
      %v1130 = vadd.f32 %v1129, %v1052
      %1131 = vadd.xlane.f32.xlu0 %v1130
      %v1132 = vpop.xlane.xlu0 %1131
      %v1133 = vadd.f32 %v973, %v1056
      %v1134 = vadd.f32 %v974, %v1060
      %v1135 = vadd.f32 %v975, %v1064
      %v1136 = vadd.f32 %v976, %v1068
      %v1137 = vadd.f32 %v977, %v1072
      %v1138 = vadd.f32 %v978, %v1076
      %v1139 = vadd.f32 %v979, %v1080
      %v1140 = vadd.f32 %v980, %v1084
      %v1141 = vadd.f32 %v981, %v1088
      %v1142 = vadd.f32 %v982, %v1092
      %v1143 = vadd.f32 %v983, %v1096
      %v1144 = vadd.f32 %v984, %v1100
      %v1145 = vadd.f32 %v985, %v1104
      %v1146 = vadd.f32 %v986, %v1108
      %v1147 = vadd.f32 %v987, %v1112
      %v1148 = vadd.f32 %v988, %v1116
      %v1149 = vadd.f32 %v989, %v1120
      %v1150 = vadd.f32 %v990, %v1124
      %v1151 = vadd.f32 %v991, %v1128
      %v1152 = vadd.f32 %v992, %v1132
      %vm1153 = vcmask 7168
      %1154 = vst.msk [vmem:[#allocation3] sm:$0xff] %vm1153, %v1133
      %1155 = vst.msk [vmem:[#allocation3 + $0x8] sm:$0xff] %vm1153, %v1134
      %1156 = vst.msk [vmem:[#allocation3 + $0x10] sm:$0xff] %vm1153, %v1135
      %1157 = vst.msk [vmem:[#allocation3 + $0x18] sm:$0xff] %vm1153, %v1136
      %1158 = vst.msk [vmem:[#allocation3 + $0x20] sm:$0xff] %vm1153, %v1137
      %1159 = vst.msk [vmem:[#allocation3 + $0x28] sm:$0xff] %vm1153, %v1138
      %1160 = vst.msk [vmem:[#allocation3 + $0x30] sm:$0xff] %vm1153, %v1139
      %1161 = vst.msk [vmem:[#allocation3 + $0x38] sm:$0xff] %vm1153, %v1140
      %1162 = vst.msk [vmem:[#allocation3 + $0x40] sm:$0xff] %vm1153, %v1141
      %1163 = vst.msk [vmem:[#allocation3 + $0x48] sm:$0xff] %vm1153, %v1142
      %1164 = vst.msk [vmem:[#allocation3 + $0x50] sm:$0xff] %vm1153, %v1143
      %1165 = vst.msk [vmem:[#allocation3 + $0x58] sm:$0xff] %vm1153, %v1144
      %1166 = vst.msk [vmem:[#allocation3 + $0x60] sm:$0xff] %vm1153, %v1145
      %1167 = vst.msk [vmem:[#allocation3 + $0x68] sm:$0xff] %vm1153, %v1146
      %1168 = vst.msk [vmem:[#allocation3 + $0x70] sm:$0xff] %vm1153, %v1147
      %1169 = vst.msk [vmem:[#allocation3 + $0x78] sm:$0xff] %vm1153, %v1148
      %1170 = vst.msk [vmem:[#allocation3 + $0x80] sm:$0xff] %vm1153, %v1149
      %1171 = vst.msk [vmem:[#allocation3 + $0x88] sm:$0xff] %vm1153, %v1150
      %1172 = vst.msk [vmem:[#allocation3 + $0x90] sm:$0xff] %vm1153, %v1151
      %1173 = vst.msk [vmem:[#allocation3 + $0x98] sm:$0xff] %vm1153, %v1152
      // Predicated region
      $region37: #{graph_convolution.1} parent=31 // pred_check
        %p1174 = pneg %p250
      $region38: #{graph_convolution.1} parent=31 // pred_check_branch
        %1176 = sbr.rel (%p1174) target = $region40
      $region39: #{graph_convolution.1} parent=31 // pred_region
        %v1177 = vld [vmem:[#allocation3] sm:$0xff]
        %v1178 = vld [vmem:[#allocation3 + $0x8] sm:$0xff]
        %v1179 = vld [vmem:[#allocation3 + $0x10] sm:$0xff]
        %v1180 = vld [vmem:[#allocation3 + $0x18] sm:$0xff]
        %v1181 = vld [vmem:[#allocation3 + $0x20] sm:$0xff]
        %v1182 = vld [vmem:[#allocation3 + $0x28] sm:$0xff]
        %v1183 = vld [vmem:[#allocation3 + $0x30] sm:$0xff]
        %v1184 = vld [vmem:[#allocation3 + $0x38] sm:$0xff]
        %v1185 = vld [vmem:[#allocation3 + $0x40] sm:$0xff]
        %v1186 = vld [vmem:[#allocation3 + $0x48] sm:$0xff]
        %v1187 = vld [vmem:[#allocation3 + $0x50] sm:$0xff]
        %v1188 = vld [vmem:[#allocation3 + $0x58] sm:$0xff]
        %v1189 = vld [vmem:[#allocation3 + $0x60] sm:$0xff]
        %v1190 = vld [vmem:[#allocation3 + $0x68] sm:$0xff]
        %v1191 = vld [vmem:[#allocation3 + $0x70] sm:$0xff]
        %v1192 = vld [vmem:[#allocation3 + $0x78] sm:$0xff]
        %v1193 = vld [vmem:[#allocation3 + $0x80] sm:$0xff]
        %v1194 = vld [vmem:[#allocation3 + $0x88] sm:$0xff]
        %v1195 = vld [vmem:[#allocation3 + $0x90] sm:$0xff]
        %v1196 = vld [vmem:[#allocation3 + $0x98] sm:$0xff]
        %v1197 = vmax.f32 %v1177, 1.0
        %v1198 = vmax.f32 %v1178, 1.0
        %v1199 = vmax.f32 %v1179, 1.0
        %v1200 = vmax.f32 %v1180, 1.0
        %v1201 = vmax.f32 %v1181, 1.0
        %v1202 = vmax.f32 %v1182, 1.0
        %v1203 = vmax.f32 %v1183, 1.0
        %v1204 = vmax.f32 %v1184, 1.0
        %v1205 = vmax.f32 %v1185, 1.0
        %v1206 = vmax.f32 %v1186, 1.0
        %v1207 = vmax.f32 %v1187, 1.0
        %v1208 = vmax.f32 %v1188, 1.0
        %v1209 = vmax.f32 %v1189, 1.0
        %v1210 = vmax.f32 %v1190, 1.0
        %v1211 = vmax.f32 %v1191, 1.0
        %v1212 = vmax.f32 %v1192, 1.0
        %v1213 = vmax.f32 %v1193, 1.0
        %v1214 = vmax.f32 %v1194, 1.0
        %v1215 = vmax.f32 %v1195, 1.0
        %v1216 = vmax.f32 %v1196, 1.0
        %v1217 = vrcp.pop %v1197
        %v1218 = vmul.f32 1.0, %v1217
        %v1219 = vrcp.pop %v1198
        %v1220 = vmul.f32 1.0, %v1219
        %v1221 = vrcp.pop %v1199
        %v1222 = vmul.f32 1.0, %v1221
        %v1223 = vrcp.pop %v1200
        %v1224 = vmul.f32 1.0, %v1223
        %v1225 = vrcp.pop %v1201
        %v1226 = vmul.f32 1.0, %v1225
        %v1227 = vrcp.pop %v1202
        %v1228 = vmul.f32 1.0, %v1227
        %v1229 = vrcp.pop %v1203
        %v1230 = vmul.f32 1.0, %v1229
        %v1231 = vrcp.pop %v1204
        %v1232 = vmul.f32 1.0, %v1231
        %v1233 = vrcp.pop %v1205
        %v1234 = vmul.f32 1.0, %v1233
        %v1235 = vrcp.pop %v1206
        %v1236 = vmul.f32 1.0, %v1235
        %v1237 = vrcp.pop %v1207
        %v1238 = vmul.f32 1.0, %v1237
        %v1239 = vrcp.pop %v1208
        %v1240 = vmul.f32 1.0, %v1239
        %v1241 = vrcp.pop %v1209
        %v1242 = vmul.f32 1.0, %v1241
        %v1243 = vrcp.pop %v1210
        %v1244 = vmul.f32 1.0, %v1243
        %v1245 = vrcp.pop %v1211
        %v1246 = vmul.f32 1.0, %v1245
        %v1247 = vrcp.pop %v1212
        %v1248 = vmul.f32 1.0, %v1247
        %v1249 = vrcp.pop %v1213
        %v1250 = vmul.f32 1.0, %v1249
        %v1251 = vrcp.pop %v1214
        %v1252 = vmul.f32 1.0, %v1251
        %v1253 = vrcp.pop %v1215
        %v1254 = vmul.f32 1.0, %v1253
        %v1255 = vrcp.pop %v1216
        %v1256 = vmul.f32 1.0, %v1255
        %v1257 = vld [vmem:[#allocation2] sm:$0xff]
        %v1258 = vld [vmem:[#allocation2 + $0x8] sm:$0xff]
        %v1259 = vld [vmem:[#allocation2 + $0x10] sm:$0xff]
        %v1260 = vld [vmem:[#allocation2 + $0x18] sm:$0xff]
        %v1261 = vld [vmem:[#allocation2 + $0x20] sm:$0xff]
        %v1262 = vld [vmem:[#allocation2 + $0x28] sm:$0xff]
        %v1263 = vld [vmem:[#allocation2 + $0x30] sm:$0xff]
        %v1264 = vld [vmem:[#allocation2 + $0x38] sm:$0xff]
        %v1265 = vld [vmem:[#allocation2 + $0x40] sm:$0xff]
        %v1266 = vld [vmem:[#allocation2 + $0x48] sm:$0xff]
        %v1267 = vld [vmem:[#allocation2 + $0x50] sm:$0xff]
        %v1268 = vld [vmem:[#allocation2 + $0x58] sm:$0xff]
        %v1269 = vld [vmem:[#allocation2 + $0x60] sm:$0xff]
        %v1270 = vld [vmem:[#allocation2 + $0x68] sm:$0xff]
        %v1271 = vld [vmem:[#allocation2 + $0x70] sm:$0xff]
        %v1272 = vld [vmem:[#allocation2 + $0x78] sm:$0xff]
        %v1273 = vld [vmem:[#allocation2 + $0x80] sm:$0xff]
        %v1274 = vld [vmem:[#allocation2 + $0x88] sm:$0xff]
        %v1275 = vld [vmem:[#allocation2 + $0x90] sm:$0xff]
        %v1276 = vld [vmem:[#allocation2 + $0x98] sm:$0xff]
        %1278 = vset.pattern.permute.xlu0 0
        %1279 = vperm.xlu0 %1278, %v1218
        %v1280 = vpop.permute.xlu0 %1279
        %1283 = vset.pattern.permute.xlu0 0
        %1284 = vperm.xlu0 %1283, %v1220
        %v1285 = vpop.permute.xlu0 %1284
        %1288 = vset.pattern.permute.xlu0 0
        %1289 = vperm.xlu0 %1288, %v1222
        %v1290 = vpop.permute.xlu0 %1289
        %1293 = vset.pattern.permute.xlu0 0
        %1294 = vperm.xlu0 %1293, %v1224
        %v1295 = vpop.permute.xlu0 %1294
        %1298 = vset.pattern.permute.xlu0 0
        %1299 = vperm.xlu0 %1298, %v1226
        %v1300 = vpop.permute.xlu0 %1299
        %1303 = vset.pattern.permute.xlu0 0
        %1304 = vperm.xlu0 %1303, %v1228
        %v1305 = vpop.permute.xlu0 %1304
        %1308 = vset.pattern.permute.xlu0 0
        %1309 = vperm.xlu0 %1308, %v1230
        %v1310 = vpop.permute.xlu0 %1309
        %1313 = vset.pattern.permute.xlu0 0
        %1314 = vperm.xlu0 %1313, %v1232
        %v1315 = vpop.permute.xlu0 %1314
        %1318 = vset.pattern.permute.xlu0 0
        %1319 = vperm.xlu0 %1318, %v1234
        %v1320 = vpop.permute.xlu0 %1319
        %1323 = vset.pattern.permute.xlu0 0
        %1324 = vperm.xlu0 %1323, %v1236
        %v1325 = vpop.permute.xlu0 %1324
        %1328 = vset.pattern.permute.xlu0 0
        %1329 = vperm.xlu0 %1328, %v1238
        %v1330 = vpop.permute.xlu0 %1329
        %1333 = vset.pattern.permute.xlu0 0
        %1334 = vperm.xlu0 %1333, %v1240
        %v1335 = vpop.permute.xlu0 %1334
        %1338 = vset.pattern.permute.xlu0 0
        %1339 = vperm.xlu0 %1338, %v1242
        %v1340 = vpop.permute.xlu0 %1339
        %1343 = vset.pattern.permute.xlu0 0
        %1344 = vperm.xlu0 %1343, %v1244
        %v1345 = vpop.permute.xlu0 %1344
        %1348 = vset.pattern.permute.xlu0 0
        %1349 = vperm.xlu0 %1348, %v1246
        %v1350 = vpop.permute.xlu0 %1349
        %1353 = vset.pattern.permute.xlu0 0
        %1354 = vperm.xlu0 %1353, %v1248
        %v1355 = vpop.permute.xlu0 %1354
        %1358 = vset.pattern.permute.xlu0 0
        %1359 = vperm.xlu0 %1358, %v1250
        %v1360 = vpop.permute.xlu0 %1359
        %1363 = vset.pattern.permute.xlu0 0
        %1364 = vperm.xlu0 %1363, %v1252
        %v1365 = vpop.permute.xlu0 %1364
        %1368 = vset.pattern.permute.xlu0 0
        %1369 = vperm.xlu0 %1368, %v1254
        %v1370 = vpop.permute.xlu0 %1369
        %1373 = vset.pattern.permute.xlu0 0
        %1374 = vperm.xlu0 %1373, %v1256
        %v1375 = vpop.permute.xlu0 %1374
        %v1377 = vmul.f32 %v1257, %v1280
        %v1378 = vmul.f32 %v1258, %v1285
        %v1379 = vmul.f32 %v1259, %v1290
        %v1380 = vmul.f32 %v1260, %v1295
        %v1381 = vmul.f32 %v1261, %v1300
        %v1382 = vmul.f32 %v1262, %v1305
        %v1383 = vmul.f32 %v1263, %v1310
        %v1384 = vmul.f32 %v1264, %v1315
        %v1385 = vmul.f32 %v1265, %v1320
        %v1386 = vmul.f32 %v1266, %v1325
        %v1387 = vmul.f32 %v1267, %v1330
        %v1388 = vmul.f32 %v1268, %v1335
        %v1389 = vmul.f32 %v1269, %v1340
        %v1390 = vmul.f32 %v1270, %v1345
        %v1391 = vmul.f32 %v1271, %v1350
        %v1392 = vmul.f32 %v1272, %v1355
        %v1393 = vmul.f32 %v1273, %v1360
        %v1394 = vmul.f32 %v1274, %v1365
        %v1395 = vmul.f32 %v1275, %v1370
        %v1396 = vmul.f32 %v1276, %v1375
        %v1397 = vld [vmem:[%s241] sm:$0xff]
        %v1398 = vld [vmem:[%s241 + $0x8] sm:$0xff]
        %v1399 = vld [vmem:[%s241 + $0x10] sm:$0xff]
        %v1400 = vld [vmem:[%s241 + $0x18] sm:$0xff]
        %v1401 = vld [vmem:[%s241 + $0x20] sm:$0xff]
        %v1402 = vld [vmem:[%s241 + $0x28] sm:$0xff]
        %v1403 = vld [vmem:[%s241 + $0x30] sm:$0xff]
        %v1404 = vld [vmem:[%s241 + $0x38] sm:$0xff]
        %v1405 = vld [vmem:[%s241 + $0x40] sm:$0xff]
        %v1406 = vld [vmem:[%s241 + $0x48] sm:$0xff]
        %v1407 = vld [vmem:[%s241 + $0x50] sm:$0xff]
        %v1408 = vld [vmem:[%s241 + $0x58] sm:$0xff]
        %v1409 = vld [vmem:[%s241 + $0x60] sm:$0xff]
        %v1410 = vld [vmem:[%s241 + $0x68] sm:$0xff]
        %v1411 = vld [vmem:[%s241 + $0x70] sm:$0xff]
        %v1412 = vld [vmem:[%s241 + $0x78] sm:$0xff]
        %v1413 = vld [vmem:[%s241 + $0x80] sm:$0xff]
        %v1414 = vld [vmem:[%s241 + $0x88] sm:$0xff]
        %v1415 = vld [vmem:[%s241 + $0x90] sm:$0xff]
        %v1416 = vld [vmem:[%s241 + $0x98] sm:$0xff]
        %v1417 = vadd.f32 %v1377, %v1397
        %v1418 = vadd.f32 %v1378, %v1398
        %v1419 = vadd.f32 %v1379, %v1399
        %v1420 = vadd.f32 %v1380, %v1400
        %v1421 = vadd.f32 %v1381, %v1401
        %v1422 = vadd.f32 %v1382, %v1402
        %v1423 = vadd.f32 %v1383, %v1403
        %v1424 = vadd.f32 %v1384, %v1404
        %v1425 = vadd.f32 %v1385, %v1405
        %v1426 = vadd.f32 %v1386, %v1406
        %v1427 = vadd.f32 %v1387, %v1407
        %v1428 = vadd.f32 %v1388, %v1408
        %v1429 = vadd.f32 %v1389, %v1409
        %v1430 = vadd.f32 %v1390, %v1410
        %v1431 = vadd.f32 %v1391, %v1411
        %v1432 = vadd.f32 %v1392, %v1412
        %v1433 = vadd.f32 %v1393, %v1413
        %v1434 = vadd.f32 %v1394, %v1414
        %v1435 = vadd.f32 %v1395, %v1415
        %v1436 = vadd.f32 %v1396, %v1416
        %1437 = vst [vmem:[%s247] sm:$0xff] %v1417
        %1438 = vst [vmem:[%s247 + $0x8] sm:$0xff] %v1418
        %1439 = vst [vmem:[%s247 + $0x10] sm:$0xff] %v1419
        %1440 = vst [vmem:[%s247 + $0x18] sm:$0xff] %v1420
        %1441 = vst [vmem:[%s247 + $0x20] sm:$0xff] %v1421
        %1442 = vst [vmem:[%s247 + $0x28] sm:$0xff] %v1422
        %1443 = vst [vmem:[%s247 + $0x30] sm:$0xff] %v1423
        %1444 = vst [vmem:[%s247 + $0x38] sm:$0xff] %v1424
        %1445 = vst [vmem:[%s247 + $0x40] sm:$0xff] %v1425
        %1446 = vst [vmem:[%s247 + $0x48] sm:$0xff] %v1426
        %1447 = vst [vmem:[%s247 + $0x50] sm:$0xff] %v1427
        %1448 = vst [vmem:[%s247 + $0x58] sm:$0xff] %v1428
        %1449 = vst [vmem:[%s247 + $0x60] sm:$0xff] %v1429
        %1450 = vst [vmem:[%s247 + $0x68] sm:$0xff] %v1430
        %1451 = vst [vmem:[%s247 + $0x70] sm:$0xff] %v1431
        %1452 = vst [vmem:[%s247 + $0x78] sm:$0xff] %v1432
        %1453 = vst [vmem:[%s247 + $0x80] sm:$0xff] %v1433
        %1454 = vst [vmem:[%s247 + $0x88] sm:$0xff] %v1434
        %1455 = vst [vmem:[%s247 + $0x90] sm:$0xff] %v1435
        %1456 = vst [vmem:[%s247 + $0x98] sm:$0xff] %v1436
      $region40: #{graph_convolution.1} parent=31 // pred_fallthru
        _
      %s1457 = smul.u32 20, %s18
      %p1458 = scmp.lt.s32.totalorder %s1457, 39
      %s1459 = scalar_select %p1458, %s1457, 39
      %s1460 = smul.addr %s1459, 8
      %s1461 = scalar_lea.vmem %s3, %s1460
      // Predicated region
      $region41: #{graph_convolution.1} parent=31 // pred_check
        %p1462 = pneg %p124
      $region42: #{graph_convolution.1} parent=31 // pred_check_branch
        %1464 = sbr.rel (%p1462) target = $region44
      $region43: #{graph_convolution.1} parent=31 // pred_region
        %s1465 = smul.u32 20, %s18
      $region44: #{graph_convolution.1} parent=31 // pred_fallthru
        _
    $region32: #{graph_convolution.1} parent=5 // pred_fallthru
      _
    %p1466 = scmp.le.s32.totalorder 2, %s9
    // Predicated region
    $region45: #{graph_convolution.1} parent=5 // pred_check
      %p1467 = pneg %p1466
    $region46: #{graph_convolution.1} parent=5 // pred_check_branch
      %1469 = sbr.rel (%p1467) target = $region48
    $region47: #{graph_convolution.1} parent=5 // pred_region
      %s1470 = ssub.s32 %s9, 2
      // Predicated region
      $region49: #{graph_convolution.1} parent=47 // pred_check
        %p1471 = pneg %p130
      $region50: #{graph_convolution.1} parent=47 // pred_check_branch
        %1473 = sbr.rel (%p1471) target = $region52
      $region51: #{graph_convolution.1} parent=47 // pred_region
        %s1474 = smul.u32 20, %s20
        %p1475 = scmp.lt.s32.totalorder %s1474, 39
        %s1476 = scalar_select %p1475, %s1474, 39
        %s1477 = smul.addr %s1476, 8
        %s1478 = scalar_lea.vmem %s3, %s1477
      $region52: #{graph_convolution.1} parent=47 // pred_fallthru
        _
    $region48: #{graph_convolution.1} parent=5 // pred_fallthru
      _
  $region6: #{graph_convolution.1} parent=0 // loop_footer
    %s13 = sadd.s32 1, %s9
  $region7: #{graph_convolution.1} parent=0 // loop_footer_branch
    %8 = sbr.rel target = $region3
  $region8: #{graph_convolution.1} parent=0 // loop_exit
    _

</llo_original>
